<compile_context>
chip_gen: v6e
topology: v6e:2x2x1
jax: 0.10.0
libtpu: 0.0.40
codegen_flags: <defaults>
</compile_context>

<pallas_src>
import functools

import jax
import jax.numpy as jnp
from jax.experimental import pallas as pl
from jax.experimental.pallas import tpu as pltpu


def _round_up(x, m):
    return ((x + m - 1) // m) * m


def _choose_tiling(B, S, max_tb=256):
    """Pick (batch tile TB, padded batch B_pad).

    TB is a multiple of 8 (full sublanes -> unmasked output stores), TB*S >= 256
    where possible (keeps the 256-row MXU on v6e/v7x fed), and B_pad/TB >= 2 so
    the "parallel" grid axis can shard across both v7x TensorCores.
    """
    mxu_rows = _round_up(max(8, -(-256 // S)), 8)
    tb = max(mxu_rows, min(max_tb, _round_up(-(-B // 2), 8)))
    b_pad = max(_round_up(B, tb), 2 * tb)
    return tb, b_pad


def _hmcn_kernel(kernel_sizes, n_levels, nk, conv_pad, *refs):
    tok_ref, et_ref, cbias_ref = refs[:3]
    fw = refs[3:3 + n_levels]                 # (K_FC, OUT_PAD) bf16 per level
    fb = refs[3 + n_levels:3 + 2 * n_levels]  # (1, OUT_PAD) f32 per level
    out_ref = refs[3 + 2 * n_levels]          # (TB, OUT_PAD) f32

    TB, S = tok_ref.shape
    V_PAD, TAPS_PAD = et_ref.shape
    OUT_PAD = out_ref.shape[1]
    N = TB * S

    # ---- embedding gather fused with ALL conv taps: one bf16 MXU matmul.
    # One-hot rows are exact in bf16.  Out-of-range token ids match no column
    # and yield a zero embedding row (nn.Embedding would wrap/error instead).
    # TODO(synk): for a large vocabulary (table not VMEM-resident, e.g. on
    # v7x's 64 MiB VMEM) replace the one-hot matmul with a DMA-based gather.
    tok = tok_ref[...]                                               # (TB, S) i32
    vid = jax.lax.broadcasted_iota(jnp.int32, (TB, S, V_PAD), 2)
    onehot = jnp.where(vid == tok[:, :, None], 1.0, 0.0).astype(jnp.bfloat16)
    onehot = onehot.reshape(N, V_PAD)          # leading-dim collapse only (V_PAD=128)
    taps = jnp.dot(onehot, et_ref[...],
                   preferred_element_type=jnp.float32)               # (N, TAPS_PAD) f32
    taps = taps.reshape(TB, S, TAPS_PAD)

    # ---- shifted adds + max-over-time.  Tap chunk dk (all kernel sizes) lives
    # at lanes [dk*conv_pad, (dk+1)*conv_pad), so every lane slice below is a
    # 128-aligned full-width block (no lane relayout); time shifts are
    # sublane-only.  Lanes of kernels that don't own tap dk hold zero weights,
    # so per-kernel garbage lanes are masked out with one full-width select.
    lane = jax.lax.broadcasted_iota(jnp.int32, (TB, conv_pad), 1)
    conv_slab = jnp.zeros((TB, conv_pad), jnp.float32)
    for ki, k in enumerate(kernel_sizes):
        L = S - k + 1
        acc = taps[:, 0:L, 0:conv_pad]
        for dk in range(1, k):
            acc = acc + taps[:, dk:dk + L, dk * conv_pad:(dk + 1) * conv_pad]
        pooled = jnp.max(acc, axis=1)          # (TB, conv_pad); valid at [ki*nk,(ki+1)*nk)
        sel = (lane >= ki * nk) & (lane < (ki + 1) * nk)
        conv_slab = jnp.where(sel, pooled, conv_slab)
    # bias + relu once after the pool: max_t(s)+b == max_t(s+b), relu/max commute.
    conv_slab = jnp.maximum(conv_slab + cbias_ref[...], 0.0)
    conv_bf = conv_slab.astype(jnp.bfloat16)

    # ---- hierarchical FC levels.  Every level reads the same lane-dense input
    # [slab | conv]; weights/biases are EXACTLY zero outside each level's own
    # column range and outside the K rows it reads, so the additive slab keeps
    # every level's logits intact and no `prev` slicing is needed.
    slab = jnp.zeros((TB, OUT_PAD), jnp.float32)
    for i in range(n_levels):
        fc_in = jnp.concatenate([slab.astype(jnp.bfloat16), conv_bf], axis=-1)
        y = jnp.dot(fc_in, fw[i][...],
                    preferred_element_type=jnp.float32) + fb[i][...]
        slab = slab + y
    out_ref[...] = slab                        # one unmasked lane-dense store


def _pack_params(params, kernel_sizes, classes):
    """Pack everything into lane-dense, MXU-friendly layouts."""
    V, E = params["emb"].shape
    NK = params["conv_b"][0].shape[1]
    n_ks = len(kernel_sizes)
    max_k = max(kernel_sizes)
    conv_dim = n_ks * NK

    V_PAD = _round_up(V, 128)
    CONV_PAD = max(128, _round_up(conv_dim, 128))
    TAPS_PAD = max_k * CONV_PAD
    OUT_PAD = max(128, _round_up(sum(classes), 128))
    K_FC = OUT_PAD + CONV_PAD

    # emb @ conv taps folded together:  emb_taps[v, dk*CONV_PAD + ki*NK + n]
    emb = params["emb"].astype(jnp.float32)
    emb_taps = jnp.zeros((V_PAD, TAPS_PAD), jnp.float32)
    for ki, k in enumerate(kernel_sizes):
        w = params["conv_w"][ki].astype(jnp.float32)             # (k, E, NK)
        for dk in range(k):
            col = dk * CONV_PAD + ki * NK
            emb_taps = emb_taps.at[:V, col:col + NK].set(emb @ w[dk])
    emb_taps = emb_taps.astype(jnp.bfloat16)                     # MXU operand

    cbias = jnp.zeros((1, CONV_PAD), jnp.float32)
    for ki in range(n_ks):
        cbias = cbias.at[:, ki * NK:(ki + 1) * NK].set(
            params["conv_b"][ki].astype(jnp.float32))

    # NOTE: correctness of the additive output slab (and of feeding level i the
    # whole slab instead of level i-1's logits) relies on fw_pad/fb_pad being
    # EXACTLY zero outside each level's column range and outside the K rows it
    # reads.  That holds by construction (jnp.zeros + .at[].set below).
    fw_pad, fb_pad = [], []
    cls_off = 0
    for i, c in enumerate(classes):
        W = params["fc_w"][i].astype(jnp.float32)                # (F_in, c)
        b = params["fc_b"][i].astype(jnp.float32)                # (1, c)
        Wp = jnp.zeros((K_FC, OUT_PAD), jnp.float32)
        if i > 0:
            c_prev = classes[i - 1]
            prev_off = cls_off - c_prev
            Wp = Wp.at[prev_off:prev_off + c_prev,
                       cls_off:cls_off + c].set(W[:c_prev])
            w_conv = W[c_prev:]
        else:
            w_conv = W
        Wp = Wp.at[OUT_PAD:OUT_PAD + conv_dim, cls_off:cls_off + c].set(w_conv)
        bp = jnp.zeros((1, OUT_PAD), jnp.float32)
        bp = bp.at[:, cls_off:cls_off + c].set(b)
        fw_pad.append(Wp.astype(jnp.bfloat16))
        fb_pad.append(bp)
        cls_off += c

    dims = dict(NK=NK, V_PAD=V_PAD, CONV_PAD=CONV_PAD, TAPS_PAD=TAPS_PAD,
                OUT_PAD=OUT_PAD, K_FC=K_FC)
    return emb_taps, cbias, fw_pad, fb_pad, dims


def hmcn_forward(tokens, params, kernel_sizes, classes):
    B, S = tokens.shape
    if S < max(kernel_sizes):
        raise ValueError("sequence length must be >= max kernel size")

    emb_taps, cbias, fw_pad, fb_pad, d = _pack_params(params, kernel_sizes, classes)
    NK, CONV_PAD, OUT_PAD = d["NK"], d["CONV_PAD"], d["OUT_PAD"]
    V_PAD, TAPS_PAD, K_FC = d["V_PAD"], d["TAPS_PAD"], d["K_FC"]

    TB, B_pad = _choose_tiling(B, S)
    nb = B_pad // TB
    if B_pad != B:
        pad = jnp.zeros((B_pad - B, S), tokens.dtype)   # padded rows -> discarded
        tokens = jnp.concatenate([tokens, pad], axis=0)
    tokens = tokens.astype(jnp.int32)

    # Constant-index weights stay VMEM resident across grid steps.  After the
    # emb->tap fusion they total well under 1 MiB, so default double-buffering
    # is harmless; if the packed table grows (large vocab), single-buffer them
    # (pipeline_mode=pl.Buffered(1)) or keep the table in HBM and DMA-gather.
    def const_spec(shape):
        return pl.BlockSpec(shape, lambda b: (0, 0))

    in_specs = ([pl.BlockSpec((TB, S), lambda b: (b, 0)),        # token tile
                 const_spec((V_PAD, TAPS_PAD)),                  # emb @ conv taps
                 const_spec((1, CONV_PAD))]                      # conv bias slab
                + [const_spec((K_FC, OUT_PAD)) for _ in fw_pad]
                + [const_spec((1, OUT_PAD)) for _ in fb_pad])
    out_spec = pl.BlockSpec((TB, OUT_PAD), lambda b: (b, 0))

    kernel = functools.partial(_hmcn_kernel, tuple(kernel_sizes), len(classes),
                               NK, CONV_PAD)
    slab = pl.pallas_call(
        kernel,
        out_shape=jax.ShapeDtypeStruct((B_pad, OUT_PAD), jnp.float32),
        grid=(nb,),
        in_specs=in_specs,
        out_specs=out_spec,
        compiler_params=pltpu.CompilerParams(
            dimension_semantics=("parallel",),
            # ~40 MiB: above the 16/32 MiB scoped defaults, comfortably under
            # v7x's 64 MiB physical; raise toward ~100 MiB on v5e/v6e if the
            # vocab/table or TB ever grows instead of shrinking the tile.
            vmem_limit_bytes=40 * 1024 * 1024),
    )(tokens, emb_taps, cbias, *fw_pad, *fb_pad)

    out, off = {}, 0
    for i, c in enumerate(classes):
        out[i] = slab[:B, off:off + c]
        off += c
    return out


def hmcn_reference(tokens, params, kernel_sizes, classes):
    """Plain-JAX (f32) reference mirroring the PyTorch forward."""
    emb = jnp.take(params["emb"], tokens, axis=0).astype(jnp.float32)
    B, S, E = emb.shape
    feats = []
    for ki, k in enumerate(kernel_sizes):
        w = params["conv_w"][ki]                                  # (k, E, NK)
        b = params["conv_b"][ki]                                  # (1, NK)
        L = S - k + 1
        sc = jnp.stack(
            [jnp.einsum("bke,ken->bn", emb[:, t:t + k, :], w) + b
             for t in range(L)], axis=1)                          # (B, L, NK)
        feats.append(jnp.max(jax.nn.relu(sc), axis=1))
    conv_feat = jnp.concatenate(feats, axis=1)
    out, prev = {}, None
    for i, c in enumerate(classes):
        inp = conv_feat if i == 0 else jnp.concatenate([prev, conv_feat], 1)
        y = inp @ params["fc_w"][i] + params["fc_b"][i]
        out[i] = y
        prev = y
    return out


def init_params(key, vocab_size, emb_size, num_kernels, kernel_sizes, classes,
                padding_index=0):
    n_keys = 1 + 2 * len(kernel_sizes) + 2 * len(classes)
    keys = list(jax.random.split(key, n_keys))
    ki = iter(keys)

    emb = 0.1 * jax.random.normal(next(ki), (vocab_size, emb_size), jnp.float32)
    emb = emb.at[padding_index].set(0.0)            # padding_idx row is zero

    conv_w, conv_b = [], []
    for k in kernel_sizes:
        conv_w.append(0.1 * jax.random.normal(
            next(ki), (k, emb_size, num_kernels), jnp.float32))
        conv_b.append(0.1 * jax.random.normal(
            next(ki), (1, num_kernels), jnp.float32))

    fc_w, fc_b = [], []
    feat_dim = num_kernels * len(kernel_sizes)
    for i, c in enumerate(classes):
        f_in = feat_dim if i == 0 else feat_dim + classes[i - 1]
        fc_w.append(0.1 * jax.random.normal(next(ki), (f_in, c), jnp.float32))
        fc_b.append(0.1 * jax.random.normal(next(ki), (1, c), jnp.float32))

    return {"emb": emb, "conv_w": conv_w, "conv_b": conv_b,
            "fc_w": fc_w, "fc_b": fc_b}


if __name__ == "__main__":
    vocab_size = 32
    emb_size = 128
    num_kernels = 8
    kernel_sizes = (2, 3, 4)
    classes = (8, 16)
    B, S = 2, 8

    key = jax.random.PRNGKey(0)
    kp, kx = jax.random.split(key)
    params = init_params(kp, vocab_size, emb_size, num_kernels,
                         kernel_sizes, classes)
    tokens = jax.random.randint(kx, (B, S), 0, vocab_size, dtype=jnp.int32)

    out = hmcn_forward(tokens, params, kernel_sizes, classes)
    out = {i: jax.block_until_ready(v) for i, v in out.items()}

    ref = hmcn_reference(tokens, params, kernel_sizes, classes)
    # bf16 MXU operands (f32 accumulation) => ~1e-2-level deltas vs f32 reference.
    for i in range(len(classes)):
        assert out[i].shape == (B, classes[i])
        assert jnp.allclose(out[i], ref[i], atol=2e-2, rtol=2e-2), f"level {i}"

    print("KERNEL_OK")
</pallas_src>

<mosaic_0001>
module attributes {stable_mosaic.version = 11 : i64} {
  func.func @_hmcn_kernel(%arg0: i32, %arg1: memref<32x8xi32, #tpu.memory_space<vmem>>, %arg2: memref<128x512xbf16, #tpu.memory_space<vmem>>, %arg3: memref<1x128xf32, #tpu.memory_space<vmem>>, %arg4: memref<256x128xbf16, #tpu.memory_space<vmem>>, %arg5: memref<256x128xbf16, #tpu.memory_space<vmem>>, %arg6: memref<1x128xf32, #tpu.memory_space<vmem>>, %arg7: memref<1x128xf32, #tpu.memory_space<vmem>>, %arg8: memref<32x128xf32, #tpu.memory_space<vmem>>) attributes {dimension_semantics = [#tpu.dimension_semantics<parallel>], iteration_bounds = array<i64: 2>, scalar_prefetch = 0 : i64, scratch_operands = 0 : i64, tpu.core_type = #tpu.core_type<tc>, window_params = [{transform_indices = @transform_0, window_bounds = array<i64: 32, 8>}, {pipeline_mode = #tpu.pipeline_mode<synchronous>, transform_indices = @transform_1, window_bounds = array<i64: 128, 512>}, {pipeline_mode = #tpu.pipeline_mode<synchronous>, transform_indices = @transform_2, window_bounds = array<i64: 1, 128>}, {pipeline_mode = #tpu.pipeline_mode<synchronous>, transform_indices = @transform_3, window_bounds = array<i64: 256, 128>}, {pipeline_mode = #tpu.pipeline_mode<synchronous>, transform_indices = @transform_4, window_bounds = array<i64: 256, 128>}, {pipeline_mode = #tpu.pipeline_mode<synchronous>, transform_indices = @transform_5, window_bounds = array<i64: 1, 128>}, {pipeline_mode = #tpu.pipeline_mode<synchronous>, transform_indices = @transform_6, window_bounds = array<i64: 1, 128>}, {transform_indices = @transform_7, window_bounds = array<i64: 32, 128>}]} {
    %c0 = arith.constant 0 : index
    %c0_0 = arith.constant 0 : index
    %0 = vector.load %arg1[%c0, %c0_0] : memref<32x8xi32, #tpu.memory_space<vmem>>, vector<32x8xi32>
    %1 = tpu.iota {dimensions = array<i32: 2>} : vector<32x8x128xi32>
    %2 = vector.shape_cast %0 : vector<32x8xi32> to vector<32x8x1xi32>
    %3 = vector.broadcast %2 : vector<32x8x1xi32> to vector<32x8x128xi32>
    %4 = arith.cmpi eq, %1, %3 : vector<32x8x128xi32>
    %cst = arith.constant 1.000000e+00 : f32
    %cst_1 = arith.constant 0.000000e+00 : f32
    %5 = vector.broadcast %cst : f32 to vector<32x8x128xf32>
    %6 = vector.broadcast %cst_1 : f32 to vector<32x8x128xf32>
    %7 = arith.select %4, %5, %6 : vector<32x8x128xi1>, vector<32x8x128xf32>
    %8 = arith.truncf %7 : vector<32x8x128xf32> to vector<32x8x128xbf16>
    %9 = vector.shape_cast %8 : vector<32x8x128xbf16> to vector<256x128xbf16>
    %c0_2 = arith.constant 0 : index
    %c0_3 = arith.constant 0 : index
    %10 = vector.load %arg2[%c0_2, %c0_3] : memref<128x512xbf16, #tpu.memory_space<vmem>>, vector<128x512xbf16>
    %cst_4 = arith.constant dense<0.000000e+00> : vector<256x512xf32>
    %11 = tpu.matmul %9, %10, %cst_4 {dimension_numbers = #tpu.dot_dimension_numbers<[1], [0], [0], [1], [0, 0, 1, 1], [], []>} : vector<256x128xbf16>, vector<128x512xbf16>, vector<256x512xf32> -> vector<256x512xf32>
    %12 = vector.shape_cast %11 : vector<256x512xf32> to vector<32x8x512xf32>
    %13 = tpu.iota {dimensions = array<i32: 1>} : vector<32x128xi32>
    %cst_5 = arith.constant 0.000000e+00 : f32
    %14 = vector.broadcast %cst_5 : f32 to vector<32x128xf32>
    %15 = vector.extract_strided_slice %12 {offsets = [0, 0, 0], sizes = [32, 7, 128], strides = [1, 1, 1]} : vector<32x8x512xf32> to vector<32x7x128xf32>
    %16 = vector.extract_strided_slice %12 {offsets = [0, 1, 128], sizes = [32, 7, 128], strides = [1, 1, 1]} : vector<32x8x512xf32> to vector<32x7x128xf32>
    %17 = arith.addf %15, %16 : vector<32x7x128xf32>
    %cst_6 = arith.constant dense<0xFF800000> : vector<32x128xf32>
    %18 = vector.multi_reduction <maximumf>, %17, %cst_6 [1] : vector<32x7x128xf32> to vector<32x128xf32>
    %c0_i32 = arith.constant 0 : i32
    %19 = vector.broadcast %c0_i32 : i32 to vector<32x128xi32>
    %20 = arith.cmpi sge, %13, %19 : vector<32x128xi32>
    %c8_i32 = arith.constant 8 : i32
    %21 = vector.broadcast %c8_i32 : i32 to vector<32x128xi32>
    %22 = arith.cmpi slt, %13, %21 : vector<32x128xi32>
    %23 = arith.andi %20, %22 : vector<32x128xi1>
    %24 = arith.select %23, %18, %14 : vector<32x128xi1>, vector<32x128xf32>
    %25 = vector.extract_strided_slice %12 {offsets = [0, 0, 0], sizes = [32, 6, 128], strides = [1, 1, 1]} : vector<32x8x512xf32> to vector<32x6x128xf32>
    %26 = vector.extract_strided_slice %12 {offsets = [0, 1, 128], sizes = [32, 6, 128], strides = [1, 1, 1]} : vector<32x8x512xf32> to vector<32x6x128xf32>
    %27 = arith.addf %25, %26 : vector<32x6x128xf32>
    %28 = vector.extract_strided_slice %12 {offsets = [0, 2, 256], sizes = [32, 6, 128], strides = [1, 1, 1]} : vector<32x8x512xf32> to vector<32x6x128xf32>
    %29 = arith.addf %27, %28 : vector<32x6x128xf32>
    %cst_7 = arith.constant dense<0xFF800000> : vector<32x128xf32>
    %30 = vector.multi_reduction <maximumf>, %29, %cst_7 [1] : vector<32x6x128xf32> to vector<32x128xf32>
    %c8_i32_8 = arith.constant 8 : i32
    %31 = vector.broadcast %c8_i32_8 : i32 to vector<32x128xi32>
    %32 = arith.cmpi sge, %13, %31 : vector<32x128xi32>
    %c16_i32 = arith.constant 16 : i32
    %33 = vector.broadcast %c16_i32 : i32 to vector<32x128xi32>
    %34 = arith.cmpi slt, %13, %33 : vector<32x128xi32>
    %35 = arith.andi %32, %34 : vector<32x128xi1>
    %36 = arith.select %35, %30, %24 : vector<32x128xi1>, vector<32x128xf32>
    %37 = vector.extract_strided_slice %12 {offsets = [0, 0, 0], sizes = [32, 5, 128], strides = [1, 1, 1]} : vector<32x8x512xf32> to vector<32x5x128xf32>
    %38 = vector.extract_strided_slice %12 {offsets = [0, 1, 128], sizes = [32, 5, 128], strides = [1, 1, 1]} : vector<32x8x512xf32> to vector<32x5x128xf32>
    %39 = arith.addf %37, %38 : vector<32x5x128xf32>
    %40 = vector.extract_strided_slice %12 {offsets = [0, 2, 256], sizes = [32, 5, 128], strides = [1, 1, 1]} : vector<32x8x512xf32> to vector<32x5x128xf32>
    %41 = arith.addf %39, %40 : vector<32x5x128xf32>
    %42 = vector.extract_strided_slice %12 {offsets = [0, 3, 384], sizes = [32, 5, 128], strides = [1, 1, 1]} : vector<32x8x512xf32> to vector<32x5x128xf32>
    %43 = arith.addf %41, %42 : vector<32x5x128xf32>
    %cst_9 = arith.constant dense<0xFF800000> : vector<32x128xf32>
    %44 = vector.multi_reduction <maximumf>, %43, %cst_9 [1] : vector<32x5x128xf32> to vector<32x128xf32>
    %c16_i32_10 = arith.constant 16 : i32
    %45 = vector.broadcast %c16_i32_10 : i32 to vector<32x128xi32>
    %46 = arith.cmpi sge, %13, %45 : vector<32x128xi32>
    %c24_i32 = arith.constant 24 : i32
    %47 = vector.broadcast %c24_i32 : i32 to vector<32x128xi32>
    %48 = arith.cmpi slt, %13, %47 : vector<32x128xi32>
    %49 = arith.andi %46, %48 : vector<32x128xi1>
    %50 = arith.select %49, %44, %36 : vector<32x128xi1>, vector<32x128xf32>
    %c0_11 = arith.constant 0 : index
    %c0_12 = arith.constant 0 : index
    %51 = vector.load %arg3[%c0_11, %c0_12] : memref<1x128xf32, #tpu.memory_space<vmem>>, vector<1x128xf32>
    %52 = vector.broadcast %51 : vector<1x128xf32> to vector<32x128xf32>
    %53 = arith.addf %50, %52 : vector<32x128xf32>
    %cst_13 = arith.constant 0.000000e+00 : f32
    %54 = vector.broadcast %cst_13 : f32 to vector<32x128xf32>
    %55 = arith.maximumf %53, %54 : vector<32x128xf32>
    %56 = arith.truncf %55 : vector<32x128xf32> to vector<32x128xbf16>
    %cst_14 = arith.constant 0.000000e+00 : f32
    %57 = vector.broadcast %cst_14 : f32 to vector<32x128xf32>
    %58 = arith.truncf %57 : vector<32x128xf32> to vector<32x128xbf16>
    %59 = tpu.concatenate %58, %56 in 1 : vector<32x128xbf16>, vector<32x128xbf16> -> vector<32x256xbf16>
    %c0_15 = arith.constant 0 : index
    %c0_16 = arith.constant 0 : index
    %60 = vector.load %arg4[%c0_15, %c0_16] : memref<256x128xbf16, #tpu.memory_space<vmem>>, vector<256x128xbf16>
    %cst_17 = arith.constant dense<0.000000e+00> : vector<32x128xf32>
    %61 = tpu.matmul %59, %60, %cst_17 {dimension_numbers = #tpu.dot_dimension_numbers<[1], [0], [0], [1], [0, 0, 1, 1], [], []>} : vector<32x256xbf16>, vector<256x128xbf16>, vector<32x128xf32> -> vector<32x128xf32>
    %c0_18 = arith.constant 0 : index
    %c0_19 = arith.constant 0 : index
    %62 = vector.load %arg6[%c0_18, %c0_19] : memref<1x128xf32, #tpu.memory_space<vmem>>, vector<1x128xf32>
    %63 = vector.broadcast %62 : vector<1x128xf32> to vector<32x128xf32>
    %64 = arith.addf %61, %63 : vector<32x128xf32>
    %65 = arith.addf %57, %64 : vector<32x128xf32>
    %66 = arith.truncf %65 : vector<32x128xf32> to vector<32x128xbf16>
    %67 = tpu.concatenate %66, %56 in 1 : vector<32x128xbf16>, vector<32x128xbf16> -> vector<32x256xbf16>
    %c0_20 = arith.constant 0 : index
    %c0_21 = arith.constant 0 : index
    %68 = vector.load %arg5[%c0_20, %c0_21] : memref<256x128xbf16, #tpu.memory_space<vmem>>, vector<256x128xbf16>
    %cst_22 = arith.constant dense<0.000000e+00> : vector<32x128xf32>
    %69 = tpu.matmul %67, %68, %cst_22 {dimension_numbers = #tpu.dot_dimension_numbers<[1], [0], [0], [1], [0, 0, 1, 1], [], []>} : vector<32x256xbf16>, vector<256x128xbf16>, vector<32x128xf32> -> vector<32x128xf32>
    %c0_23 = arith.constant 0 : index
    %c0_24 = arith.constant 0 : index
    %70 = vector.load %arg7[%c0_23, %c0_24] : memref<1x128xf32, #tpu.memory_space<vmem>>, vector<1x128xf32>
    %71 = vector.broadcast %70 : vector<1x128xf32> to vector<32x128xf32>
    %72 = arith.addf %69, %71 : vector<32x128xf32>
    %73 = arith.addf %65, %72 : vector<32x128xf32>
    %c0_25 = arith.constant 0 : index
    %c0_26 = arith.constant 0 : index
    %74 = vector.load %arg8[%c0_25, %c0_26] : memref<32x128xf32, #tpu.memory_space<vmem>>, vector<32x128xf32>
    tpu.vector_store %arg8[%c0_25, %c0_26], %73 {strides = array<i32>} : memref<32x128xf32, #tpu.memory_space<vmem>>, vector<32x128xf32>,
    return
  }
  func.func @transform_0(%arg0: i32) -> (i32, i32) {
    %c0_i32 = arith.constant 0 : i32
    %c0_i32_0 = arith.constant 0 : i32
    return %arg0, %c0_i32 : i32, i32
  }
  func.func @transform_1(%arg0: i32) -> (i32, i32) {
    %c0_i32 = arith.constant 0 : i32
    %c0_i32_0 = arith.constant 0 : i32
    %c0_i32_1 = arith.constant 0 : i32
    return %c0_i32, %c0_i32_0 : i32, i32
  }
  func.func @transform_2(%arg0: i32) -> (i32, i32) {
    %c0_i32 = arith.constant 0 : i32
    %c0_i32_0 = arith.constant 0 : i32
    %c0_i32_1 = arith.constant 0 : i32
    return %c0_i32, %c0_i32_0 : i32, i32
  }
  func.func @transform_3(%arg0: i32) -> (i32, i32) {
    %c0_i32 = arith.constant 0 : i32
    %c0_i32_0 = arith.constant 0 : i32
    %c0_i32_1 = arith.constant 0 : i32
    return %c0_i32, %c0_i32_0 : i32, i32
  }
  func.func @transform_4(%arg0: i32) -> (i32, i32) {
    %c0_i32 = arith.constant 0 : i32
    %c0_i32_0 = arith.constant 0 : i32
    %c0_i32_1 = arith.constant 0 : i32
    return %c0_i32, %c0_i32_0 : i32, i32
  }
  func.func @transform_5(%arg0: i32) -> (i32, i32) {
    %c0_i32 = arith.constant 0 : i32
    %c0_i32_0 = arith.constant 0 : i32
    %c0_i32_1 = arith.constant 0 : i32
    return %c0_i32, %c0_i32_0 : i32, i32
  }
  func.func @transform_6(%arg0: i32) -> (i32, i32) {
    %c0_i32 = arith.constant 0 : i32
    %c0_i32_0 = arith.constant 0 : i32
    %c0_i32_1 = arith.constant 0 : i32
    return %c0_i32, %c0_i32_0 : i32, i32
  }
  func.func @transform_7(%arg0: i32) -> (i32, i32) {
    %c0_i32 = arith.constant 0 : i32
    %c0_i32_0 = arith.constant 0 : i32
    return %arg0, %c0_i32 : i32, i32
  }
}

</mosaic_0001>

<llo_original>
// kernel: tpu_custom_call.1
$region0: #{tpu_custom_call.1}
  #allocation0 [shape = 'u32[]', space=smem, size = 0x4, offset = 0x4, fixed_abs, tag = 'smem constant byte address 0x4 - core index']
  #allocation1 [shape = 'u32[144,128]{1,0:T(1,128)}', space=vmem, size = 0x12000, scoped, tag = 'internal scratch']
  %s0 = inlined_call_operand.vmem [shape: s32[64,8], index: 0, kind: input, shape index: {}]
  %s1 = inlined_call_operand.hbm [shape: bf16[128,512], index: 1, kind: input, shape index: {}]
  %s2 = inlined_call_operand.vmem [shape: f32[1,128], index: 2, kind: input, shape index: {}]
  %s3 = inlined_call_operand.hbm [shape: bf16[256,128], index: 3, kind: input, shape index: {}]
  %s4 = inlined_call_operand.hbm [shape: bf16[256,128], index: 4, kind: input, shape index: {}]
  %s5 = inlined_call_operand.vmem [shape: f32[1,128], index: 5, kind: input, shape index: {}]
  %s6 = inlined_call_operand.vmem [shape: f32[1,128], index: 6, kind: input, shape index: {}]
  %s7 = inlined_call_operand.hbm [shape: f32[64,128], index: 7, kind: output, shape index: {}]
  %s8 = sld [smem:[#allocation0]]
  $region73: #{tpu_custom_call.1} parent=0
    _
  %s10 = ssub.s32 1, %s8
  %s11 = scalar_select 0, %s10, %s8
  $region1: #{tpu_custom_call.1} parent=0
    #allocation2 [shape = 'u8[131072]{0}', space=vmem, size = 0x20000, scoped, tag = 'input window, operand 1, single buffered']
    #allocation3 [shape = 's32[2]{0}', space=sflag, size = 0x8, scoped, tag = 'scoped memory for tpu_custom_call.1']
    #allocation4 [shape = 's32[2]{0}', space=sflag, size = 0x8, scoped, tag = 'scoped memory for tpu_custom_call.1']
    #allocation5 [shape = 'u8[65536]{0}', space=vmem, size = 0x10000, scoped, tag = 'input window, operand 3, single buffered']
    #allocation6 [shape = 's32[1]{0}', space=sflag, size = 0x4, scoped, tag = 'scoped memory for tpu_custom_call.1']
    #allocation7 [shape = 'u8[65536]{0}', space=vmem, size = 0x10000, scoped, tag = 'input window, operand 4, single buffered']
    #allocation8 [shape = 'u8[32768]{0}', space=vmem, size = 0x8000, scoped, tag = 'output window, operand 0']
    %12 = vsyncpa [#allocation3], 0
    %13 = vsyncpa [#allocation6], 0
    %14 = vsyncpa [#allocation4], 0
    %s15 = scalar_lea.sflag [#allocation4], 1
    %16 = vsyncpa %s15, 0
    loop: start=0, step=1, limit=4
    $region2: #{tpu_custom_call.1} parent=1 // loop_pre_header
      _
    $region3: #{tpu_custom_call.1} parent=1 // loop_header
      %s18 = sphi 0, %s22
      %p19 = scmp.ge.s32.totalorder %s18, 4
      %s28 = sphi 0, %s30
      %s31 = sphi 0, %s28
      %s32 = sphi 0, %s31
      %s48 = sphi 0, %s32
      %s52 = sphi 0, %s52
      %s54 = sphi 0, %s52
      %s55 = sphi 0, %s54
      %s69 = sphi 0, %s55
      %s73 = sphi 0, %s73
      %s75 = sphi 0, %s73
      %s76 = sphi 0, %s75
      %s90 = sphi 0, %s76
      %s94 = sphi 0, %s94
      %s96 = sphi 0, %s94
      %s97 = sphi 0, %s96
      %s111 = sphi 0, %s97
      %s115 = sphi 0, %s115
      %s117 = sphi 0, %s115
      %s118 = sphi 0, %s117
      %s132 = sphi 0, %s118
      %s136 = sphi 0, %s136
      %s138 = sphi 0, %s136
      %s139 = sphi 0, %s138
      %s153 = sphi 0, %s139
      %s157 = sphi 0, %s157
      %s159 = sphi 0, %s157
      %s160 = sphi 0, %s159
      %s174 = sphi 0, %s160
      %s180 = sphi 0, %s182
      %s183 = sphi 0, %s180
      %s184 = sphi 0, %s183
      %s200 = sphi 0, %s184
    $region4: #{tpu_custom_call.1} parent=1 // loop_header_branch
      %21 = sbr.rel (%p19) target = $region8
    $region5: #{tpu_custom_call.1} parent=1 // loop_body
      %s23 = ssub.s32 %s18, 1
      %s24 = ssub.s32 %s18, 2
      %s25 = sadd.s32 %s18, 1
      %s26 = ssub.s32 %s18, %s25
      %p27 = scmp.eq.s32.totalorder %s26, 0
      %s29 = sadd.s32 %s28, 1
      %s30 = scalar_select %p27, %s28, %s29
      %p33 = pneg %p27
      %p34 = scmp.eq.s32.totalorder %s18, 1
      %p35 = por %p33, %p34
      %p36 = scmp.ne.s32.totalorder %s28, %s31
      %p37 = scmp.eq.s32.totalorder %s18, 0
      %p38 = por %p36, %p37
      %p39 = scmp.ne.s32.totalorder %s28, %s31
      %p40 = scmp.eq.s32.totalorder %s23, 1
      %p41 = por %p39, %p40
      %p42 = scmp.ne.s32.totalorder %s31, %s32
      %p43 = scmp.eq.s32.totalorder %s23, 0
      %p44 = por %p42, %p43
      %p45 = scmp.ne.s32.totalorder %s31, %s32
      %p46 = scmp.eq.s32.totalorder %s24, 1
      %p47 = por %p45, %p46
      %p49 = scmp.ne.s32.totalorder %s32, %s48
      %p50 = scmp.eq.s32.totalorder %s24, 0
      %p51 = por %p49, %p50
      %s53 = sadd.s32 %s52, 1
      %p56 = scmp.eq.s32.totalorder %s18, 1
      %p57 = scmp.ne.s32.totalorder %s52, %s54
      %p58 = scmp.eq.s32.totalorder %s18, 0
      %p59 = por %p57, %p58
      %p60 = scmp.ne.s32.totalorder %s52, %s54
      %p61 = scmp.eq.s32.totalorder %s23, 1
      %p62 = por %p60, %p61
      %p63 = scmp.ne.s32.totalorder %s54, %s55
      %p64 = scmp.eq.s32.totalorder %s23, 0
      %p65 = por %p63, %p64
      %p66 = scmp.ne.s32.totalorder %s54, %s55
      %p67 = scmp.eq.s32.totalorder %s24, 1
      %p68 = por %p66, %p67
      %p70 = scmp.ne.s32.totalorder %s55, %s69
      %p71 = scmp.eq.s32.totalorder %s24, 0
      %p72 = por %p70, %p71
      %s74 = sadd.s32 %s73, 1
      %p77 = scmp.eq.s32.totalorder %s18, 1
      %p78 = scmp.ne.s32.totalorder %s73, %s75
      %p79 = scmp.eq.s32.totalorder %s18, 0
      %p80 = por %p78, %p79
      %p81 = scmp.ne.s32.totalorder %s73, %s75
      %p82 = scmp.eq.s32.totalorder %s23, 1
      %p83 = por %p81, %p82
      %p84 = scmp.ne.s32.totalorder %s75, %s76
      %p85 = scmp.eq.s32.totalorder %s23, 0
      %p86 = por %p84, %p85
      %p87 = scmp.ne.s32.totalorder %s75, %s76
      %p88 = scmp.eq.s32.totalorder %s24, 1
      %p89 = por %p87, %p88
      %p91 = scmp.ne.s32.totalorder %s76, %s90
      %p92 = scmp.eq.s32.totalorder %s24, 0
      %p93 = por %p91, %p92
      %s95 = sadd.s32 %s94, 1
      %p98 = scmp.eq.s32.totalorder %s18, 1
      %p99 = scmp.ne.s32.totalorder %s94, %s96
      %p100 = scmp.eq.s32.totalorder %s18, 0
      %p101 = por %p99, %p100
      %p102 = scmp.ne.s32.totalorder %s94, %s96
      %p103 = scmp.eq.s32.totalorder %s23, 1
      %p104 = por %p102, %p103
      %p105 = scmp.ne.s32.totalorder %s96, %s97
      %p106 = scmp.eq.s32.totalorder %s23, 0
      %p107 = por %p105, %p106
      %p108 = scmp.ne.s32.totalorder %s96, %s97
      %p109 = scmp.eq.s32.totalorder %s24, 1
      %p110 = por %p108, %p109
      %p112 = scmp.ne.s32.totalorder %s97, %s111
      %p113 = scmp.eq.s32.totalorder %s24, 0
      %p114 = por %p112, %p113
      %s116 = sadd.s32 %s115, 1
      %p119 = scmp.eq.s32.totalorder %s18, 1
      %p120 = scmp.ne.s32.totalorder %s115, %s117
      %p121 = scmp.eq.s32.totalorder %s18, 0
      %p122 = por %p120, %p121
      %p123 = scmp.ne.s32.totalorder %s115, %s117
      %p124 = scmp.eq.s32.totalorder %s23, 1
      %p125 = por %p123, %p124
      %p126 = scmp.ne.s32.totalorder %s117, %s118
      %p127 = scmp.eq.s32.totalorder %s23, 0
      %p128 = por %p126, %p127
      %p129 = scmp.ne.s32.totalorder %s117, %s118
      %p130 = scmp.eq.s32.totalorder %s24, 1
      %p131 = por %p129, %p130
      %p133 = scmp.ne.s32.totalorder %s118, %s132
      %p134 = scmp.eq.s32.totalorder %s24, 0
      %p135 = por %p133, %p134
      %s137 = sadd.s32 %s136, 1
      %p140 = scmp.eq.s32.totalorder %s18, 1
      %p141 = scmp.ne.s32.totalorder %s136, %s138
      %p142 = scmp.eq.s32.totalorder %s18, 0
      %p143 = por %p141, %p142
      %p144 = scmp.ne.s32.totalorder %s136, %s138
      %p145 = scmp.eq.s32.totalorder %s23, 1
      %p146 = por %p144, %p145
      %p147 = scmp.ne.s32.totalorder %s138, %s139
      %p148 = scmp.eq.s32.totalorder %s23, 0
      %p149 = por %p147, %p148
      %p150 = scmp.ne.s32.totalorder %s138, %s139
      %p151 = scmp.eq.s32.totalorder %s24, 1
      %p152 = por %p150, %p151
      %p154 = scmp.ne.s32.totalorder %s139, %s153
      %p155 = scmp.eq.s32.totalorder %s24, 0
      %p156 = por %p154, %p155
      %s158 = sadd.s32 %s157, 1
      %p161 = scmp.eq.s32.totalorder %s18, 1
      %p162 = scmp.ne.s32.totalorder %s157, %s159
      %p163 = scmp.eq.s32.totalorder %s18, 0
      %p164 = por %p162, %p163
      %p165 = scmp.ne.s32.totalorder %s157, %s159
      %p166 = scmp.eq.s32.totalorder %s23, 1
      %p167 = por %p165, %p166
      %p168 = scmp.ne.s32.totalorder %s159, %s160
      %p169 = scmp.eq.s32.totalorder %s23, 0
      %p170 = por %p168, %p169
      %p171 = scmp.ne.s32.totalorder %s159, %s160
      %p172 = scmp.eq.s32.totalorder %s24, 1
      %p173 = por %p171, %p172
      %p175 = scmp.ne.s32.totalorder %s160, %s174
      %p176 = scmp.eq.s32.totalorder %s24, 0
      %p177 = por %p175, %p176
      %s178 = ssub.s32 %s18, %s25
      %p179 = scmp.eq.s32.totalorder %s178, 0
      %s181 = sadd.s32 %s180, 1
      %s182 = scalar_select %p179, %s180, %s181
      %p185 = pneg %p179
      %p186 = scmp.eq.s32.totalorder %s18, 1
      %p187 = por %p185, %p186
      %p188 = scmp.ne.s32.totalorder %s180, %s183
      %p189 = scmp.eq.s32.totalorder %s18, 0
      %p190 = por %p188, %p189
      %p191 = scmp.ne.s32.totalorder %s180, %s183
      %p192 = scmp.eq.s32.totalorder %s23, 1
      %p193 = por %p191, %p192
      %p194 = scmp.ne.s32.totalorder %s183, %s184
      %p195 = scmp.eq.s32.totalorder %s23, 0
      %p196 = por %p194, %p195
      %p197 = scmp.ne.s32.totalorder %s183, %s184
      %p198 = scmp.eq.s32.totalorder %s24, 1
      %p199 = por %p197, %p198
      %p201 = scmp.ne.s32.totalorder %s184, %s200
      %p202 = scmp.eq.s32.totalorder %s24, 0
      %p203 = por %p201, %p202
      %p204 = scmp.le.s32.totalorder 1, %s18
      %p205 = scmp.lt.s32.totalorder %s18, 3
      %p206 = pnand %p204, %p205
      %p207 = pneg %p206
      // Predicated region
      $region9: #{tpu_custom_call.1} parent=5 // pred_check
        _
      $region10: #{tpu_custom_call.1} parent=5 // pred_check_branch
        %209 = sbr.rel (%p206) target = $region12
      $region11: #{tpu_custom_call.1} parent=5 // pred_region
        %s210 = ssub.s32 %s18, 1
        // Predicated region
        $region13: #{tpu_custom_call.1} parent=11 // pred_check
          %p211 = pneg %p65
        $region14: #{tpu_custom_call.1} parent=11 // pred_check_branch
          %213 = sbr.rel (%p211) target = $region16
        $region15: #{tpu_custom_call.1} parent=11 // pred_region
          %s215 = ssub.s32 4096, 4096
          %216 = vsyncadd [#allocation3], %s215
          %s217 = sshll.u32 [#allocation2], 4
          %s218 = int_to_ptr.vmem [resolvable:$true] %s217
          %223 = dma.hbm_to_vmem [thread:$0]  %s1, 4096, %s218, [#allocation3], 256, 256, 16
        $region16: #{tpu_custom_call.1} parent=11 // pred_fallthru
          _
        // Predicated region
        $region17: #{tpu_custom_call.1} parent=11 // pred_check
          %p224 = pneg %p86
        $region18: #{tpu_custom_call.1} parent=11 // pred_check_branch
          %226 = sbr.rel (%p224) target = $region20
        $region19: #{tpu_custom_call.1} parent=11 // pred_region
          _
        $region20: #{tpu_custom_call.1} parent=11 // pred_fallthru
          _
        // Predicated region
        $region21: #{tpu_custom_call.1} parent=11 // pred_check
          %p227 = pneg %p107
        $region22: #{tpu_custom_call.1} parent=11 // pred_check_branch
          %229 = sbr.rel (%p227) target = $region24
        $region23: #{tpu_custom_call.1} parent=11 // pred_region
          %s231 = ssub.s32 2048, 2048
          %232 = vsyncadd [#allocation6], %s231
          %s233 = sshll.u32 [#allocation5], 4
          %s234 = int_to_ptr.vmem [resolvable:$true] %s233
          %239 = dma.hbm_to_vmem [thread:$0]  %s3, 2048, %s234, [#allocation6], 64, 64, 4
        $region24: #{tpu_custom_call.1} parent=11 // pred_fallthru
          _
        // Predicated region
        $region25: #{tpu_custom_call.1} parent=11 // pred_check
          %p240 = pneg %p128
        $region26: #{tpu_custom_call.1} parent=11 // pred_check_branch
          %242 = sbr.rel (%p240) target = $region28
        $region27: #{tpu_custom_call.1} parent=11 // pred_region
          %s244 = ssub.s32 2048, 2048
          %245 = vsyncadd [#allocation6], %s244
          %s246 = sshll.u32 [#allocation7], 4
          %s247 = int_to_ptr.vmem [resolvable:$true] %s246
          %252 = dma.hbm_to_vmem [thread:$0]  %s4, 2048, %s247, [#allocation6], 64, 64, 4
        $region28: #{tpu_custom_call.1} parent=11 // pred_fallthru
          _
        // Predicated region
        $region29: #{tpu_custom_call.1} parent=11 // pred_check
          %p253 = pneg %p149
        $region30: #{tpu_custom_call.1} parent=11 // pred_check_branch
          %255 = sbr.rel (%p253) target = $region32
        $region31: #{tpu_custom_call.1} parent=11 // pred_region
          _
        $region32: #{tpu_custom_call.1} parent=11 // pred_fallthru
          _
        // Predicated region
        $region33: #{tpu_custom_call.1} parent=11 // pred_check
          %p256 = pneg %p170
        $region34: #{tpu_custom_call.1} parent=11 // pred_check_branch
          %258 = sbr.rel (%p256) target = $region36
        $region35: #{tpu_custom_call.1} parent=11 // pred_region
          _
        $region36: #{tpu_custom_call.1} parent=11 // pred_fallthru
          _
      $region12: #{tpu_custom_call.1} parent=5 // pred_fallthru
        _
      %p259 = scmp.lt.s32.totalorder %s18, 2
      // Predicated region
      $region37: #{tpu_custom_call.1} parent=5 // pred_check
        %p260 = pneg %p259
      $region38: #{tpu_custom_call.1} parent=5 // pred_check_branch
        %262 = sbr.rel (%p260) target = $region40
      $region39: #{tpu_custom_call.1} parent=5 // pred_region
        // Predicated region
        $region41: #{tpu_custom_call.1} parent=39 // pred_check
          %p263 = pneg %p38
        $region42: #{tpu_custom_call.1} parent=39 // pred_check_branch
          %265 = sbr.rel (%p263) target = $region44
        $region43: #{tpu_custom_call.1} parent=39 // pred_region
          %s266 = smul.u32 4, %s18
          %p267 = scmp.lt.s32.totalorder %s266, 7
          %s268 = scalar_select %p267, %s266, 7
          %s269 = smul.addr %s268, 8
          %s270 = scalar_lea.vmem %s0, %s269
          %s271 = smul.u32 4, %s18
        $region44: #{tpu_custom_call.1} parent=39 // pred_fallthru
          _
      $region40: #{tpu_custom_call.1} parent=5 // pred_fallthru
        _
      %p272 = scmp.le.s32.totalorder 1, %s18
      %p273 = scmp.lt.s32.totalorder %s18, 3
      %p274 = pnand %p272, %p273
      %p275 = pneg %p274
      // Predicated region
      $region45: #{tpu_custom_call.1} parent=5 // pred_check
        _
      $region46: #{tpu_custom_call.1} parent=5 // pred_check_branch
        %277 = sbr.rel (%p274) target = $region48
      $region47: #{tpu_custom_call.1} parent=5 // pred_region
        %s278 = ssub.s32 %s18, 1
        // Predicated region
        $region49: #{tpu_custom_call.1} parent=47 // pred_check
          %p279 = pneg %p65
        $region50: #{tpu_custom_call.1} parent=47 // pred_check_branch
          %281 = sbr.rel (%p279) target = $region52
        $region51: #{tpu_custom_call.1} parent=47 // pred_region
          %282 = dma.done [#allocation3], 4096
        $region52: #{tpu_custom_call.1} parent=47 // pred_fallthru
          _
        // Predicated region
        $region53: #{tpu_custom_call.1} parent=47 // pred_check
          %p283 = pneg %p107
        $region54: #{tpu_custom_call.1} parent=47 // pred_check_branch
          %285 = sbr.rel (%p283) target = $region56
        $region55: #{tpu_custom_call.1} parent=47 // pred_region
          %286 = dma.done [#allocation6], 2048
        $region56: #{tpu_custom_call.1} parent=47 // pred_fallthru
          _
        // Predicated region
        $region57: #{tpu_custom_call.1} parent=47 // pred_check
          %p287 = pneg %p128
        $region58: #{tpu_custom_call.1} parent=47 // pred_check_branch
          %289 = sbr.rel (%p287) target = $region60
        $region59: #{tpu_custom_call.1} parent=47 // pred_region
          %290 = dma.done [#allocation6], 2048
        $region60: #{tpu_custom_call.1} parent=47 // pred_fallthru
          _
        %s291 = smul.u32 4, %s23
        %p292 = scmp.lt.s32.totalorder %s291, 7
        %s293 = scalar_select %p292, %s291, 7
        %s294 = smul.addr %s293, 8
        %s295 = scalar_lea.vmem %s0, %s294
        %p296 = pneg %p44
        %p297 = pneg %p41
        %p298 = pneg %p65
        %p299 = pneg %p62
        %p300 = pneg %p86
        %p301 = pneg %p83
        %p302 = pneg %p107
        %p303 = pneg %p104
        %p304 = pneg %p128
        %p305 = pneg %p125
        %p306 = pneg %p149
        %p307 = pneg %p146
        %p308 = pneg %p170
        %p309 = pneg %p167
        %p310 = pneg %p196
        %p311 = pneg %p193
        %s312 = sand.u32 %s183, 1
        %s313 = scalar_lea.sflag [#allocation4], %s312
        %s314 = sand.u32 %s183, 1
        %s315 = smul.addr %s314, 32
        %s316 = scalar_lea.vmem [#allocation8], %s315
        %s317 = smul.u32 4, %s23
        %p318 = scmp.lt.s32.totalorder %s317, 7
        %s319 = scalar_select %p318, %s317, 7
        %s320 = smul.addr %s319, 8
        %s321 = scalar_lea.vmem %s0, %s320
        %s322 = smul.u32 4, %s23
        %s323 = smul.u32 4, %s23
        %v325 = vld [vmem:[%s321] sm:$0xff]
        %v326 = vld [vmem:[%s321 + $0x8] sm:$0xff]
        %v327 = vld [vmem:[%s321 + $0x10] sm:$0xff]
        %v328 = vld [vmem:[%s321 + $0x18] sm:$0xff]
        %v329 = vlaneseq
        %v330 = vand.u32 %v329, 127
        %v331 = vlaneseq
        %v332 = vshrl.u32 %v331, 7
        %v333 = vsub.s32 0, %v332
        %v334 = vrot.slane %v325, %v333
        %336 = vbcast.lane.b32.xlu0 %v334, 256
        %v337 = vpop.permute.xlu0 %336
        %v338 = vlaneseq
        %v339 = vshrl.u32 %v338, 7
        %v340 = vsub.s32 1, %v339
        %v341 = vrot.slane %v325, %v340
        %343 = vbcast.lane.b32.xlu0 %v341, 256
        %v344 = vpop.permute.xlu0 %343
        %v345 = vlaneseq
        %v346 = vshrl.u32 %v345, 7
        %v347 = vsub.s32 2, %v346
        %v348 = vrot.slane %v325, %v347
        %350 = vbcast.lane.b32.xlu0 %v348, 256
        %v351 = vpop.permute.xlu0 %350
        %v352 = vlaneseq
        %v353 = vshrl.u32 %v352, 7
        %v354 = vsub.s32 3, %v353
        %v355 = vrot.slane %v325, %v354
        %357 = vbcast.lane.b32.xlu0 %v355, 256
        %v358 = vpop.permute.xlu0 %357
        %v359 = vlaneseq
        %v360 = vshrl.u32 %v359, 7
        %v361 = vsub.s32 4, %v360
        %v362 = vrot.slane %v325, %v361
        %364 = vbcast.lane.b32.xlu0 %v362, 256
        %v365 = vpop.permute.xlu0 %364
        %v366 = vlaneseq
        %v367 = vshrl.u32 %v366, 7
        %v368 = vsub.s32 5, %v367
        %v369 = vrot.slane %v325, %v368
        %371 = vbcast.lane.b32.xlu0 %v369, 256
        %v372 = vpop.permute.xlu0 %371
        %v373 = vlaneseq
        %v374 = vshrl.u32 %v373, 7
        %v375 = vsub.s32 6, %v374
        %v376 = vrot.slane %v325, %v375
        %378 = vbcast.lane.b32.xlu0 %v376, 256
        %v379 = vpop.permute.xlu0 %378
        %v380 = vlaneseq
        %v381 = vshrl.u32 %v380, 7
        %v382 = vsub.s32 7, %v381
        %v383 = vrot.slane %v325, %v382
        %385 = vbcast.lane.b32.xlu0 %v383, 256
        %v386 = vpop.permute.xlu0 %385
        %v387 = vlaneseq
        %v388 = vshrl.u32 %v387, 7
        %v389 = vsub.s32 0, %v388
        %v390 = vrot.slane %v326, %v389
        %392 = vbcast.lane.b32.xlu0 %v390, 256
        %v393 = vpop.permute.xlu0 %392
        %v394 = vlaneseq
        %v395 = vshrl.u32 %v394, 7
        %v396 = vsub.s32 1, %v395
        %v397 = vrot.slane %v326, %v396
        %399 = vbcast.lane.b32.xlu0 %v397, 256
        %v400 = vpop.permute.xlu0 %399
        %v401 = vlaneseq
        %v402 = vshrl.u32 %v401, 7
        %v403 = vsub.s32 2, %v402
        %v404 = vrot.slane %v326, %v403
        %406 = vbcast.lane.b32.xlu0 %v404, 256
        %v407 = vpop.permute.xlu0 %406
        %v408 = vlaneseq
        %v409 = vshrl.u32 %v408, 7
        %v410 = vsub.s32 3, %v409
        %v411 = vrot.slane %v326, %v410
        %413 = vbcast.lane.b32.xlu0 %v411, 256
        %v414 = vpop.permute.xlu0 %413
        %v415 = vlaneseq
        %v416 = vshrl.u32 %v415, 7
        %v417 = vsub.s32 4, %v416
        %v418 = vrot.slane %v326, %v417
        %420 = vbcast.lane.b32.xlu0 %v418, 256
        %v421 = vpop.permute.xlu0 %420
        %v422 = vlaneseq
        %v423 = vshrl.u32 %v422, 7
        %v424 = vsub.s32 5, %v423
        %v425 = vrot.slane %v326, %v424
        %427 = vbcast.lane.b32.xlu0 %v425, 256
        %v428 = vpop.permute.xlu0 %427
        %v429 = vlaneseq
        %v430 = vshrl.u32 %v429, 7
        %v431 = vsub.s32 6, %v430
        %v432 = vrot.slane %v326, %v431
        %434 = vbcast.lane.b32.xlu0 %v432, 256
        %v435 = vpop.permute.xlu0 %434
        %v436 = vlaneseq
        %v437 = vshrl.u32 %v436, 7
        %v438 = vsub.s32 7, %v437
        %v439 = vrot.slane %v326, %v438
        %441 = vbcast.lane.b32.xlu0 %v439, 256
        %v442 = vpop.permute.xlu0 %441
        %v443 = vlaneseq
        %v444 = vshrl.u32 %v443, 7
        %v445 = vsub.s32 0, %v444
        %v446 = vrot.slane %v327, %v445
        %448 = vbcast.lane.b32.xlu0 %v446, 256
        %v449 = vpop.permute.xlu0 %448
        %v450 = vlaneseq
        %v451 = vshrl.u32 %v450, 7
        %v452 = vsub.s32 1, %v451
        %v453 = vrot.slane %v327, %v452
        %455 = vbcast.lane.b32.xlu0 %v453, 256
        %v456 = vpop.permute.xlu0 %455
        %v457 = vlaneseq
        %v458 = vshrl.u32 %v457, 7
        %v459 = vsub.s32 2, %v458
        %v460 = vrot.slane %v327, %v459
        %462 = vbcast.lane.b32.xlu0 %v460, 256
        %v463 = vpop.permute.xlu0 %462
        %v464 = vlaneseq
        %v465 = vshrl.u32 %v464, 7
        %v466 = vsub.s32 3, %v465
        %v467 = vrot.slane %v327, %v466
        %469 = vbcast.lane.b32.xlu0 %v467, 256
        %v470 = vpop.permute.xlu0 %469
        %v471 = vlaneseq
        %v472 = vshrl.u32 %v471, 7
        %v473 = vsub.s32 4, %v472
        %v474 = vrot.slane %v327, %v473
        %476 = vbcast.lane.b32.xlu0 %v474, 256
        %v477 = vpop.permute.xlu0 %476
        %v478 = vlaneseq
        %v479 = vshrl.u32 %v478, 7
        %v480 = vsub.s32 5, %v479
        %v481 = vrot.slane %v327, %v480
        %483 = vbcast.lane.b32.xlu0 %v481, 256
        %v484 = vpop.permute.xlu0 %483
        %v485 = vlaneseq
        %v486 = vshrl.u32 %v485, 7
        %v487 = vsub.s32 6, %v486
        %v488 = vrot.slane %v327, %v487
        %490 = vbcast.lane.b32.xlu0 %v488, 256
        %v491 = vpop.permute.xlu0 %490
        %v492 = vlaneseq
        %v493 = vshrl.u32 %v492, 7
        %v494 = vsub.s32 7, %v493
        %v495 = vrot.slane %v327, %v494
        %497 = vbcast.lane.b32.xlu0 %v495, 256
        %v498 = vpop.permute.xlu0 %497
        %v499 = vlaneseq
        %v500 = vshrl.u32 %v499, 7
        %v501 = vsub.s32 0, %v500
        %v502 = vrot.slane %v328, %v501
        %504 = vbcast.lane.b32.xlu0 %v502, 256
        %v505 = vpop.permute.xlu0 %504
        %v506 = vlaneseq
        %v507 = vshrl.u32 %v506, 7
        %v508 = vsub.s32 1, %v507
        %v509 = vrot.slane %v328, %v508
        %511 = vbcast.lane.b32.xlu0 %v509, 256
        %v512 = vpop.permute.xlu0 %511
        %v513 = vlaneseq
        %v514 = vshrl.u32 %v513, 7
        %v515 = vsub.s32 2, %v514
        %v516 = vrot.slane %v328, %v515
        %518 = vbcast.lane.b32.xlu0 %v516, 256
        %v519 = vpop.permute.xlu0 %518
        %v520 = vlaneseq
        %v521 = vshrl.u32 %v520, 7
        %v522 = vsub.s32 3, %v521
        %v523 = vrot.slane %v328, %v522
        %525 = vbcast.lane.b32.xlu0 %v523, 256
        %v526 = vpop.permute.xlu0 %525
        %v527 = vlaneseq
        %v528 = vshrl.u32 %v527, 7
        %v529 = vsub.s32 4, %v528
        %v530 = vrot.slane %v328, %v529
        %532 = vbcast.lane.b32.xlu0 %v530, 256
        %v533 = vpop.permute.xlu0 %532
        %v534 = vlaneseq
        %v535 = vshrl.u32 %v534, 7
        %v536 = vsub.s32 5, %v535
        %v537 = vrot.slane %v328, %v536
        %539 = vbcast.lane.b32.xlu0 %v537, 256
        %v540 = vpop.permute.xlu0 %539
        %v541 = vlaneseq
        %v542 = vshrl.u32 %v541, 7
        %v543 = vsub.s32 6, %v542
        %v544 = vrot.slane %v328, %v543
        %546 = vbcast.lane.b32.xlu0 %v544, 256
        %v547 = vpop.permute.xlu0 %546
        %v548 = vlaneseq
        %v549 = vshrl.u32 %v548, 7
        %v550 = vsub.s32 7, %v549
        %v551 = vrot.slane %v328, %v550
        %553 = vbcast.lane.b32.xlu0 %v551, 256
        %v554 = vpop.permute.xlu0 %553
        %vm555 = vcmp.eq.s32.totalorder %v330, %v337
        %vm556 = vcmp.eq.s32.totalorder %v330, %v344
        %vm557 = vcmp.eq.s32.totalorder %v330, %v351
        %vm558 = vcmp.eq.s32.totalorder %v330, %v358
        %vm559 = vcmp.eq.s32.totalorder %v330, %v365
        %vm560 = vcmp.eq.s32.totalorder %v330, %v372
        %vm561 = vcmp.eq.s32.totalorder %v330, %v379
        %vm562 = vcmp.eq.s32.totalorder %v330, %v386
        %vm563 = vcmp.eq.s32.totalorder %v330, %v393
        %vm564 = vcmp.eq.s32.totalorder %v330, %v400
        %vm565 = vcmp.eq.s32.totalorder %v330, %v407
        %vm566 = vcmp.eq.s32.totalorder %v330, %v414
        %vm567 = vcmp.eq.s32.totalorder %v330, %v421
        %vm568 = vcmp.eq.s32.totalorder %v330, %v428
        %vm569 = vcmp.eq.s32.totalorder %v330, %v435
        %vm570 = vcmp.eq.s32.totalorder %v330, %v442
        %vm571 = vcmp.eq.s32.totalorder %v330, %v449
        %vm572 = vcmp.eq.s32.totalorder %v330, %v456
        %vm573 = vcmp.eq.s32.totalorder %v330, %v463
        %vm574 = vcmp.eq.s32.totalorder %v330, %v470
        %vm575 = vcmp.eq.s32.totalorder %v330, %v477
        %vm576 = vcmp.eq.s32.totalorder %v330, %v484
        %vm577 = vcmp.eq.s32.totalorder %v330, %v491
        %vm578 = vcmp.eq.s32.totalorder %v330, %v498
        %vm579 = vcmp.eq.s32.totalorder %v330, %v505
        %vm580 = vcmp.eq.s32.totalorder %v330, %v512
        %vm581 = vcmp.eq.s32.totalorder %v330, %v519
        %vm582 = vcmp.eq.s32.totalorder %v330, %v526
        %vm583 = vcmp.eq.s32.totalorder %v330, %v533
        %vm584 = vcmp.eq.s32.totalorder %v330, %v540
        %vm585 = vcmp.eq.s32.totalorder %v330, %v547
        %vm586 = vcmp.eq.s32.totalorder %v330, %v554
        %v587 = vsel %vm555, 1.0, 0.0
        %v588 = vsel %vm556, 1.0, 0.0
        %v589 = vsel %vm557, 1.0, 0.0
        %v590 = vsel %vm558, 1.0, 0.0
        %v591 = vsel %vm559, 1.0, 0.0
        %v592 = vsel %vm560, 1.0, 0.0
        %v593 = vsel %vm561, 1.0, 0.0
        %v594 = vsel %vm562, 1.0, 0.0
        %v595 = vsel %vm563, 1.0, 0.0
        %v596 = vsel %vm564, 1.0, 0.0
        %v597 = vsel %vm565, 1.0, 0.0
        %v598 = vsel %vm566, 1.0, 0.0
        %v599 = vsel %vm567, 1.0, 0.0
        %v600 = vsel %vm568, 1.0, 0.0
        %v601 = vsel %vm569, 1.0, 0.0
        %v602 = vsel %vm570, 1.0, 0.0
        %v603 = vsel %vm571, 1.0, 0.0
        %v604 = vsel %vm572, 1.0, 0.0
        %v605 = vsel %vm573, 1.0, 0.0
        %v606 = vsel %vm574, 1.0, 0.0
        %v607 = vsel %vm575, 1.0, 0.0
        %v608 = vsel %vm576, 1.0, 0.0
        %v609 = vsel %vm577, 1.0, 0.0
        %v610 = vsel %vm578, 1.0, 0.0
        %v611 = vsel %vm579, 1.0, 0.0
        %v612 = vsel %vm580, 1.0, 0.0
        %v613 = vsel %vm581, 1.0, 0.0
        %v614 = vsel %vm582, 1.0, 0.0
        %v615 = vsel %vm583, 1.0, 0.0
        %v616 = vsel %vm584, 1.0, 0.0
        %v617 = vsel %vm585, 1.0, 0.0
        %v618 = vsel %vm586, 1.0, 0.0
        %v619 = vpack.c.bf16 %v587, %v587
        %v620 = vpack.c.bf16 %v588, %v588
        %v621 = vpack.c.bf16 %v589, %v589
        %v622 = vpack.c.bf16 %v590, %v590
        %v623 = vpack.c.bf16 %v591, %v591
        %v624 = vpack.c.bf16 %v592, %v592
        %v625 = vpack.c.bf16 %v593, %v593
        %v626 = vpack.c.bf16 %v594, %v594
        %v627 = vpack.c.bf16 %v595, %v595
        %v628 = vpack.c.bf16 %v596, %v596
        %v629 = vpack.c.bf16 %v597, %v597
        %v630 = vpack.c.bf16 %v598, %v598
        %v631 = vpack.c.bf16 %v599, %v599
        %v632 = vpack.c.bf16 %v600, %v600
        %v633 = vpack.c.bf16 %v601, %v601
        %v634 = vpack.c.bf16 %v602, %v602
        %v635 = vpack.c.bf16 %v603, %v603
        %v636 = vpack.c.bf16 %v604, %v604
        %v637 = vpack.c.bf16 %v605, %v605
        %v638 = vpack.c.bf16 %v606, %v606
        %v639 = vpack.c.bf16 %v607, %v607
        %v640 = vpack.c.bf16 %v608, %v608
        %v641 = vpack.c.bf16 %v609, %v609
        %v642 = vpack.c.bf16 %v610, %v610
        %v643 = vpack.c.bf16 %v611, %v611
        %v644 = vpack.c.bf16 %v612, %v612
        %v645 = vpack.c.bf16 %v613, %v613
        %v646 = vpack.c.bf16 %v614, %v614
        %v647 = vpack.c.bf16 %v615, %v615
        %v648 = vpack.c.bf16 %v616, %v616
        %v649 = vpack.c.bf16 %v617, %v617
        %v650 = vpack.c.bf16 %v618, %v618
        %v651 = vld [vmem:[#allocation2] sm:$0xff]
        %v652 = vld [vmem:[#allocation2 + $0x8] sm:$0xff]
        %v653 = vld [vmem:[#allocation2 + $0x10] sm:$0xff]
        %v654 = vld [vmem:[#allocation2 + $0x18] sm:$0xff]
        %v655 = vld [vmem:[#allocation2 + $0x20] sm:$0xff]
        %v656 = vld [vmem:[#allocation2 + $0x28] sm:$0xff]
        %v657 = vld [vmem:[#allocation2 + $0x30] sm:$0xff]
        %v658 = vld [vmem:[#allocation2 + $0x38] sm:$0xff]
        %v659 = vld [vmem:[#allocation2 + $0x40] sm:$0xff]
        %v660 = vld [vmem:[#allocation2 + $0x48] sm:$0xff]
        %v661 = vld [vmem:[#allocation2 + $0x50] sm:$0xff]
        %v662 = vld [vmem:[#allocation2 + $0x58] sm:$0xff]
        %v663 = vld [vmem:[#allocation2 + $0x60] sm:$0xff]
        %v664 = vld [vmem:[#allocation2 + $0x68] sm:$0xff]
        %v665 = vld [vmem:[#allocation2 + $0x70] sm:$0xff]
        %v666 = vld [vmem:[#allocation2 + $0x78] sm:$0xff]
        %v667 = vld [vmem:[#allocation2 + $0x80] sm:$0xff]
        %v668 = vld [vmem:[#allocation2 + $0x88] sm:$0xff]
        %v669 = vld [vmem:[#allocation2 + $0x90] sm:$0xff]
        %v670 = vld [vmem:[#allocation2 + $0x98] sm:$0xff]
        %v671 = vld [vmem:[#allocation2 + $0xa0] sm:$0xff]
        %v672 = vld [vmem:[#allocation2 + $0xa8] sm:$0xff]
        %v673 = vld [vmem:[#allocation2 + $0xb0] sm:$0xff]
        %v674 = vld [vmem:[#allocation2 + $0xb8] sm:$0xff]
        %v675 = vld [vmem:[#allocation2 + $0xc0] sm:$0xff]
        %v676 = vld [vmem:[#allocation2 + $0xc8] sm:$0xff]
        %v677 = vld [vmem:[#allocation2 + $0xd0] sm:$0xff]
        %v678 = vld [vmem:[#allocation2 + $0xd8] sm:$0xff]
        %v679 = vld [vmem:[#allocation2 + $0xe0] sm:$0xff]
        %v680 = vld [vmem:[#allocation2 + $0xe8] sm:$0xff]
        %v681 = vld [vmem:[#allocation2 + $0xf0] sm:$0xff]
        %v682 = vld [vmem:[#allocation2 + $0xf8] sm:$0xff]
        %v715 = vunpack.c.l.b16 %v619
        %v716 = vunpack.c.l.b16 %v620
        %v717 = vunpack.c.l.b16 %v621
        %v718 = vunpack.c.l.b16 %v622
        %v719 = vunpack.c.l.b16 %v623
        %v720 = vunpack.c.l.b16 %v624
        %v721 = vunpack.c.l.b16 %v625
        %v722 = vunpack.c.l.b16 %v626
        %v723 = vunpack.c.l.b16 %v627
        %v724 = vunpack.c.l.b16 %v628
        %v725 = vunpack.c.l.b16 %v629
        %v726 = vunpack.c.l.b16 %v630
        %v727 = vunpack.c.l.b16 %v631
        %v728 = vunpack.c.l.b16 %v632
        %v729 = vunpack.c.l.b16 %v633
        %v730 = vunpack.c.l.b16 %v634
        %v731 = vunpack.c.l.b16 %v635
        %v732 = vunpack.c.l.b16 %v636
        %v733 = vunpack.c.l.b16 %v637
        %v734 = vunpack.c.l.b16 %v638
        %v735 = vunpack.c.l.b16 %v639
        %v736 = vunpack.c.l.b16 %v640
        %v737 = vunpack.c.l.b16 %v641
        %v738 = vunpack.c.l.b16 %v642
        %v739 = vunpack.c.l.b16 %v643
        %v740 = vunpack.c.l.b16 %v644
        %v741 = vunpack.c.l.b16 %v645
        %v742 = vunpack.c.l.b16 %v646
        %v743 = vunpack.c.l.b16 %v647
        %v744 = vunpack.c.l.b16 %v648
        %v745 = vunpack.c.l.b16 %v649
        %v746 = vunpack.c.l.b16 %v650
        %v747 = vpack.c.b16 %v716, %v715
        %v748 = vpack.c.b16 %v718, %v717
        %v749 = vpack.c.b16 %v720, %v719
        %v750 = vpack.c.b16 %v722, %v721
        %v751 = vpack.c.b16 %v724, %v723
        %v752 = vpack.c.b16 %v726, %v725
        %v753 = vpack.c.b16 %v728, %v727
        %v754 = vpack.c.b16 %v730, %v729
        %v755 = vpack.c.b16 %v732, %v731
        %v756 = vpack.c.b16 %v734, %v733
        %v757 = vpack.c.b16 %v736, %v735
        %v758 = vpack.c.b16 %v738, %v737
        %v759 = vpack.c.b16 %v740, %v739
        %v760 = vpack.c.b16 %v742, %v741
        %v761 = vpack.c.b16 %v744, %v743
        %v762 = vpack.c.b16 %v746, %v745
        %v811 = vunpack.c.l.b16 %v651
        %v812 = vunpack.c.h.b16 %v651
        %v813 = vunpack.c.l.b16 %v652
        %v814 = vunpack.c.h.b16 %v652
        %v815 = vunpack.c.l.b16 %v653
        %v816 = vunpack.c.h.b16 %v653
        %v817 = vunpack.c.l.b16 %v654
        %v818 = vunpack.c.h.b16 %v654
        %v819 = vunpack.c.l.b16 %v655
        %v820 = vunpack.c.h.b16 %v655
        %v821 = vunpack.c.l.b16 %v656
        %v822 = vunpack.c.h.b16 %v656
        %v823 = vunpack.c.l.b16 %v657
        %v824 = vunpack.c.h.b16 %v657
        %v825 = vunpack.c.l.b16 %v658
        %v826 = vunpack.c.h.b16 %v658
        %v827 = vunpack.c.l.b16 %v659
        %v828 = vunpack.c.h.b16 %v659
        %v829 = vunpack.c.l.b16 %v660
        %v830 = vunpack.c.h.b16 %v660
        %v831 = vunpack.c.l.b16 %v661
        %v832 = vunpack.c.h.b16 %v661
        %v833 = vunpack.c.l.b16 %v662
        %v834 = vunpack.c.h.b16 %v662
        %v835 = vunpack.c.l.b16 %v663
        %v836 = vunpack.c.h.b16 %v663
        %v837 = vunpack.c.l.b16 %v664
        %v838 = vunpack.c.h.b16 %v664
        %v839 = vunpack.c.l.b16 %v665
        %v840 = vunpack.c.h.b16 %v665
        %v841 = vunpack.c.l.b16 %v666
        %v842 = vunpack.c.h.b16 %v666
        %v843 = vunpack.c.l.b16 %v667
        %v844 = vunpack.c.h.b16 %v667
        %v845 = vunpack.c.l.b16 %v668
        %v846 = vunpack.c.h.b16 %v668
        %v847 = vunpack.c.l.b16 %v669
        %v848 = vunpack.c.h.b16 %v669
        %v849 = vunpack.c.l.b16 %v670
        %v850 = vunpack.c.h.b16 %v670
        %v851 = vunpack.c.l.b16 %v671
        %v852 = vunpack.c.h.b16 %v671
        %v853 = vunpack.c.l.b16 %v672
        %v854 = vunpack.c.h.b16 %v672
        %v855 = vunpack.c.l.b16 %v673
        %v856 = vunpack.c.h.b16 %v673
        %v857 = vunpack.c.l.b16 %v674
        %v858 = vunpack.c.h.b16 %v674
        %v859 = vunpack.c.l.b16 %v675
        %v860 = vunpack.c.h.b16 %v675
        %v861 = vunpack.c.l.b16 %v676
        %v862 = vunpack.c.h.b16 %v676
        %v863 = vunpack.c.l.b16 %v677
        %v864 = vunpack.c.h.b16 %v677
        %v865 = vunpack.c.l.b16 %v678
        %v866 = vunpack.c.h.b16 %v678
        %v867 = vunpack.c.l.b16 %v679
        %v868 = vunpack.c.h.b16 %v679
        %v869 = vunpack.c.l.b16 %v680
        %v870 = vunpack.c.h.b16 %v680
        %v871 = vunpack.c.l.b16 %v681
        %v872 = vunpack.c.h.b16 %v681
        %v873 = vunpack.c.l.b16 %v682
        %v874 = vunpack.c.h.b16 %v682
        %v875 = vpack.c.b16 %v815, %v811
        %v876 = vpack.c.b16 %v816, %v812
        %v877 = vpack.c.b16 %v817, %v813
        %v878 = vpack.c.b16 %v818, %v814
        %v879 = vpack.c.b16 %v823, %v819
        %v880 = vpack.c.b16 %v824, %v820
        %v881 = vpack.c.b16 %v825, %v821
        %v882 = vpack.c.b16 %v826, %v822
        %v883 = vpack.c.b16 %v831, %v827
        %v884 = vpack.c.b16 %v832, %v828
        %v885 = vpack.c.b16 %v833, %v829
        %v886 = vpack.c.b16 %v834, %v830
        %v887 = vpack.c.b16 %v839, %v835
        %v888 = vpack.c.b16 %v840, %v836
        %v889 = vpack.c.b16 %v841, %v837
        %v890 = vpack.c.b16 %v842, %v838
        %v891 = vpack.c.b16 %v847, %v843
        %v892 = vpack.c.b16 %v848, %v844
        %v893 = vpack.c.b16 %v849, %v845
        %v894 = vpack.c.b16 %v850, %v846
        %v895 = vpack.c.b16 %v855, %v851
        %v896 = vpack.c.b16 %v856, %v852
        %v897 = vpack.c.b16 %v857, %v853
        %v898 = vpack.c.b16 %v858, %v854
        %v899 = vpack.c.b16 %v863, %v859
        %v900 = vpack.c.b16 %v864, %v860
        %v901 = vpack.c.b16 %v865, %v861
        %v902 = vpack.c.b16 %v866, %v862
        %v903 = vpack.c.b16 %v871, %v867
        %v904 = vpack.c.b16 %v872, %v868
        %v905 = vpack.c.b16 %v873, %v869
        %v906 = vpack.c.b16 %v874, %v870
        %939 = vmatprep.subr.bf16.mxu0 %v904
        %940 = vmatpush1.bf16.msra.mxu0 %v903
        %941 = vmatprep.subr.bf16.mxu0 %v900
        %942 = vmatpush1.bf16.msra.mxu0 %v899
        %943 = vmatprep.subr.bf16.mxu0 %v896
        %944 = vmatpush1.bf16.msra.mxu0 %v895
        %945 = vmatprep.subr.bf16.mxu0 %v892
        %946 = vmatpush1.bf16.msra.mxu0 %v891
        %947 = vmatprep.subr.bf16.mxu0 %v888
        %948 = vmatpush1.bf16.msra.mxu0 %v887
        %949 = vmatprep.subr.bf16.mxu0 %v884
        %950 = vmatpush1.bf16.msra.mxu0 %v883
        %951 = vmatprep.subr.bf16.mxu0 %v880
        %952 = vmatpush1.bf16.msra.mxu0 %v879
        %953 = vmatprep.subr.bf16.mxu0 %v876
        %954 = vmatpush1.bf16.msra.mxu0 %v875
        %955 = vmatprep.subr.bf16.mxu0 0
        %956 = vmatpush2.bf16.msra.mxu0 0
        %957 = vmatprep.subr.bf16.mxu0 0
        %958 = vmatpush2.bf16.msra.mxu0 0
        %959 = vmatprep.subr.bf16.mxu0 0
        %960 = vmatpush2.bf16.msra.mxu0 0
        %961 = vmatprep.subr.bf16.mxu0 0
        %962 = vmatpush2.bf16.msra.mxu0 0
        %963 = vmatprep.subr.bf16.mxu0 0
        %964 = vmatpush2.bf16.msra.mxu0 0
        %965 = vmatprep.subr.bf16.mxu0 0
        %966 = vmatpush2.bf16.msra.mxu0 0
        %967 = vmatprep.subr.bf16.mxu0 0
        %968 = vmatpush2.bf16.msra.mxu0 0
        %969 = vmatprep.subr.bf16.mxu0 0
        %970 = vmatpush2.bf16.msra.mxu0 0
        %971 = vmatprep.mubr.bf16.mxu0 0
        %972 = vmatmul.mubr.bf16.gmra.mxu0 %v747
        %v973 = vpop.f32.mrf.mxu0
        %v974 = vadd.f32 0.0, %v973
        %v975 = vpop.f32.mrf.mxu0
        %v976 = vadd.f32 0.0, %v975
        %v977 = vpop.f32.mrf.mxu0
        %v978 = vadd.f32 0.0, %v977
        %v979 = vpop.f32.mrf.mxu0
        %v980 = vadd.f32 0.0, %v979
        %981 = vmatprep.mubr.bf16.mxu0 0
        %982 = vmatmul.mubr.bf16.gmra.mxu0 %v748
        %v983 = vpop.f32.mrf.mxu0
        %v984 = vadd.f32 0.0, %v983
        %v985 = vpop.f32.mrf.mxu0
        %v986 = vadd.f32 0.0, %v985
        %v987 = vpop.f32.mrf.mxu0
        %v988 = vadd.f32 0.0, %v987
        %v989 = vpop.f32.mrf.mxu0
        %v990 = vadd.f32 0.0, %v989
        %991 = vmatprep.mubr.bf16.mxu0 0
        %992 = vmatmul.mubr.bf16.gmra.mxu0 %v749
        %v993 = vpop.f32.mrf.mxu0
        %v994 = vadd.f32 0.0, %v993
        %v995 = vpop.f32.mrf.mxu0
        %v996 = vadd.f32 0.0, %v995
        %v997 = vpop.f32.mrf.mxu0
        %v998 = vadd.f32 0.0, %v997
        %v999 = vpop.f32.mrf.mxu0
        %v1000 = vadd.f32 0.0, %v999
        %1001 = vmatprep.mubr.bf16.mxu0 0
        %1002 = vmatmul.mubr.bf16.gmra.mxu0 %v750
        %v1003 = vpop.f32.mrf.mxu0
        %v1004 = vadd.f32 0.0, %v1003
        %v1005 = vpop.f32.mrf.mxu0
        %v1006 = vadd.f32 0.0, %v1005
        %v1007 = vpop.f32.mrf.mxu0
        %v1008 = vadd.f32 0.0, %v1007
        %v1009 = vpop.f32.mrf.mxu0
        %v1010 = vadd.f32 0.0, %v1009
        %1011 = vmatprep.mubr.bf16.mxu0 0
        %1012 = vmatmul.mubr.bf16.gmra.mxu0 %v751
        %v1013 = vpop.f32.mrf.mxu0
        %v1014 = vadd.f32 0.0, %v1013
        %v1015 = vpop.f32.mrf.mxu0
        %v1016 = vadd.f32 0.0, %v1015
        %v1017 = vpop.f32.mrf.mxu0
        %v1018 = vadd.f32 0.0, %v1017
        %v1019 = vpop.f32.mrf.mxu0
        %v1020 = vadd.f32 0.0, %v1019
        %1021 = vmatprep.mubr.bf16.mxu0 0
        %1022 = vmatmul.mubr.bf16.gmra.mxu0 %v752
        %v1023 = vpop.f32.mrf.mxu0
        %v1024 = vadd.f32 0.0, %v1023
        %v1025 = vpop.f32.mrf.mxu0
        %v1026 = vadd.f32 0.0, %v1025
        %v1027 = vpop.f32.mrf.mxu0
        %v1028 = vadd.f32 0.0, %v1027
        %v1029 = vpop.f32.mrf.mxu0
        %v1030 = vadd.f32 0.0, %v1029
        %1031 = vmatprep.mubr.bf16.mxu0 0
        %1032 = vmatmul.mubr.bf16.gmra.mxu0 %v753
        %v1033 = vpop.f32.mrf.mxu0
        %v1034 = vadd.f32 0.0, %v1033
        %v1035 = vpop.f32.mrf.mxu0
        %v1036 = vadd.f32 0.0, %v1035
        %v1037 = vpop.f32.mrf.mxu0
        %v1038 = vadd.f32 0.0, %v1037
        %v1039 = vpop.f32.mrf.mxu0
        %v1040 = vadd.f32 0.0, %v1039
        %1041 = vmatprep.mubr.bf16.mxu0 0
        %1042 = vmatmul.mubr.bf16.gmra.mxu0 %v754
        %v1043 = vpop.f32.mrf.mxu0
        %v1044 = vadd.f32 0.0, %v1043
        %v1045 = vpop.f32.mrf.mxu0
        %v1046 = vadd.f32 0.0, %v1045
        %v1047 = vpop.f32.mrf.mxu0
        %v1048 = vadd.f32 0.0, %v1047
        %v1049 = vpop.f32.mrf.mxu0
        %v1050 = vadd.f32 0.0, %v1049
        %1051 = vmatprep.mubr.bf16.mxu0 0
        %1052 = vmatmul.mubr.bf16.gmra.mxu0 %v755
        %v1053 = vpop.f32.mrf.mxu0
        %v1054 = vadd.f32 0.0, %v1053
        %v1055 = vpop.f32.mrf.mxu0
        %v1056 = vadd.f32 0.0, %v1055
        %v1057 = vpop.f32.mrf.mxu0
        %v1058 = vadd.f32 0.0, %v1057
        %v1059 = vpop.f32.mrf.mxu0
        %v1060 = vadd.f32 0.0, %v1059
        %1061 = vmatprep.mubr.bf16.mxu0 0
        %1062 = vmatmul.mubr.bf16.gmra.mxu0 %v756
        %v1063 = vpop.f32.mrf.mxu0
        %v1064 = vadd.f32 0.0, %v1063
        %v1065 = vpop.f32.mrf.mxu0
        %v1066 = vadd.f32 0.0, %v1065
        %v1067 = vpop.f32.mrf.mxu0
        %v1068 = vadd.f32 0.0, %v1067
        %v1069 = vpop.f32.mrf.mxu0
        %v1070 = vadd.f32 0.0, %v1069
        %1071 = vmatprep.mubr.bf16.mxu0 0
        %1072 = vmatmul.mubr.bf16.gmra.mxu0 %v757
        %v1073 = vpop.f32.mrf.mxu0
        %v1074 = vadd.f32 0.0, %v1073
        %v1075 = vpop.f32.mrf.mxu0
        %v1076 = vadd.f32 0.0, %v1075
        %v1077 = vpop.f32.mrf.mxu0
        %v1078 = vadd.f32 0.0, %v1077
        %v1079 = vpop.f32.mrf.mxu0
        %v1080 = vadd.f32 0.0, %v1079
        %1081 = vmatprep.mubr.bf16.mxu0 0
        %1082 = vmatmul.mubr.bf16.gmra.mxu0 %v758
        %v1083 = vpop.f32.mrf.mxu0
        %v1084 = vadd.f32 0.0, %v1083
        %v1085 = vpop.f32.mrf.mxu0
        %v1086 = vadd.f32 0.0, %v1085
        %v1087 = vpop.f32.mrf.mxu0
        %v1088 = vadd.f32 0.0, %v1087
        %v1089 = vpop.f32.mrf.mxu0
        %v1090 = vadd.f32 0.0, %v1089
        %1091 = vmatprep.mubr.bf16.mxu0 0
        %1092 = vmatmul.mubr.bf16.gmra.mxu0 %v759
        %v1093 = vpop.f32.mrf.mxu0
        %v1094 = vadd.f32 0.0, %v1093
        %v1095 = vpop.f32.mrf.mxu0
        %v1096 = vadd.f32 0.0, %v1095
        %v1097 = vpop.f32.mrf.mxu0
        %v1098 = vadd.f32 0.0, %v1097
        %v1099 = vpop.f32.mrf.mxu0
        %v1100 = vadd.f32 0.0, %v1099
        %1101 = vmatprep.mubr.bf16.mxu0 0
        %1102 = vmatmul.mubr.bf16.gmra.mxu0 %v760
        %v1103 = vpop.f32.mrf.mxu0
        %v1104 = vadd.f32 0.0, %v1103
        %v1105 = vpop.f32.mrf.mxu0
        %v1106 = vadd.f32 0.0, %v1105
        %v1107 = vpop.f32.mrf.mxu0
        %v1108 = vadd.f32 0.0, %v1107
        %v1109 = vpop.f32.mrf.mxu0
        %v1110 = vadd.f32 0.0, %v1109
        %1111 = vmatprep.mubr.bf16.mxu0 0
        %1112 = vmatmul.mubr.bf16.gmra.mxu0 %v761
        %v1113 = vpop.f32.mrf.mxu0
        %v1114 = vadd.f32 0.0, %v1113
        %v1115 = vpop.f32.mrf.mxu0
        %v1116 = vadd.f32 0.0, %v1115
        %v1117 = vpop.f32.mrf.mxu0
        %v1118 = vadd.f32 0.0, %v1117
        %v1119 = vpop.f32.mrf.mxu0
        %v1120 = vadd.f32 0.0, %v1119
        %1121 = vmatprep.mubr.bf16.mxu0 0
        %1122 = vmatmul.mubr.bf16.gmra.mxu0 %v762
        %v1123 = vpop.f32.mrf.mxu0
        %v1124 = vadd.f32 0.0, %v1123
        %v1125 = vpop.f32.mrf.mxu0
        %v1126 = vadd.f32 0.0, %v1125
        %v1127 = vpop.f32.mrf.mxu0
        %v1128 = vadd.f32 0.0, %v1127
        %v1129 = vpop.f32.mrf.mxu0
        %v1130 = vadd.f32 0.0, %v1129
        %1131 = vdwg.mxu0
        %1132 = vmatprep.subr.bf16.mxu0 %v906
        %1133 = vmatpush1.bf16.msra.mxu0 %v905
        %1134 = vmatprep.subr.bf16.mxu0 %v902
        %1135 = vmatpush1.bf16.msra.mxu0 %v901
        %1136 = vmatprep.subr.bf16.mxu0 %v898
        %1137 = vmatpush1.bf16.msra.mxu0 %v897
        %1138 = vmatprep.subr.bf16.mxu0 %v894
        %1139 = vmatpush1.bf16.msra.mxu0 %v893
        %1140 = vmatprep.subr.bf16.mxu0 %v890
        %1141 = vmatpush1.bf16.msra.mxu0 %v889
        %1142 = vmatprep.subr.bf16.mxu0 %v886
        %1143 = vmatpush1.bf16.msra.mxu0 %v885
        %1144 = vmatprep.subr.bf16.mxu0 %v882
        %1145 = vmatpush1.bf16.msra.mxu0 %v881
        %1146 = vmatprep.subr.bf16.mxu0 %v878
        %1147 = vmatpush1.bf16.msra.mxu0 %v877
        %1148 = vmatprep.subr.bf16.mxu0 0
        %1149 = vmatpush2.bf16.msra.mxu0 0
        %1150 = vmatprep.subr.bf16.mxu0 0
        %1151 = vmatpush2.bf16.msra.mxu0 0
        %1152 = vmatprep.subr.bf16.mxu0 0
        %1153 = vmatpush2.bf16.msra.mxu0 0
        %1154 = vmatprep.subr.bf16.mxu0 0
        %1155 = vmatpush2.bf16.msra.mxu0 0
        %1156 = vmatprep.subr.bf16.mxu0 0
        %1157 = vmatpush2.bf16.msra.mxu0 0
        %1158 = vmatprep.subr.bf16.mxu0 0
        %1159 = vmatpush2.bf16.msra.mxu0 0
        %1160 = vmatprep.subr.bf16.mxu0 0
        %1161 = vmatpush2.bf16.msra.mxu0 0
        %1162 = vmatprep.subr.bf16.mxu0 0
        %1163 = vmatpush2.bf16.msra.mxu0 0
        %1164 = vmatprep.mubr.bf16.mxu0 0
        %1165 = vmatmul.mubr.bf16.gmra.mxu0 %v747
        %v1166 = vpop.f32.mrf.mxu0
        %v1167 = vadd.f32 0.0, %v1166
        %v1168 = vpop.f32.mrf.mxu0
        %v1169 = vadd.f32 0.0, %v1168
        %v1170 = vpop.f32.mrf.mxu0
        %v1171 = vadd.f32 0.0, %v1170
        %v1172 = vpop.f32.mrf.mxu0
        %v1173 = vadd.f32 0.0, %v1172
        %1174 = vmatprep.mubr.bf16.mxu0 0
        %1175 = vmatmul.mubr.bf16.gmra.mxu0 %v748
        %v1176 = vpop.f32.mrf.mxu0
        %v1177 = vadd.f32 0.0, %v1176
        %v1178 = vpop.f32.mrf.mxu0
        %v1179 = vadd.f32 0.0, %v1178
        %v1180 = vpop.f32.mrf.mxu0
        %v1181 = vadd.f32 0.0, %v1180
        %v1182 = vpop.f32.mrf.mxu0
        %v1183 = vadd.f32 0.0, %v1182
        %1184 = vmatprep.mubr.bf16.mxu0 0
        %1185 = vmatmul.mubr.bf16.gmra.mxu0 %v749
        %v1186 = vpop.f32.mrf.mxu0
        %v1187 = vadd.f32 0.0, %v1186
        %v1188 = vpop.f32.mrf.mxu0
        %v1189 = vadd.f32 0.0, %v1188
        %v1190 = vpop.f32.mrf.mxu0
        %v1191 = vadd.f32 0.0, %v1190
        %v1192 = vpop.f32.mrf.mxu0
        %v1193 = vadd.f32 0.0, %v1192
        %1194 = vmatprep.mubr.bf16.mxu0 0
        %1195 = vmatmul.mubr.bf16.gmra.mxu0 %v750
        %v1196 = vpop.f32.mrf.mxu0
        %v1197 = vadd.f32 0.0, %v1196
        %v1198 = vpop.f32.mrf.mxu0
        %v1199 = vadd.f32 0.0, %v1198
        %v1200 = vpop.f32.mrf.mxu0
        %v1201 = vadd.f32 0.0, %v1200
        %v1202 = vpop.f32.mrf.mxu0
        %v1203 = vadd.f32 0.0, %v1202
        %1204 = vmatprep.mubr.bf16.mxu0 0
        %1205 = vmatmul.mubr.bf16.gmra.mxu0 %v751
        %v1206 = vpop.f32.mrf.mxu0
        %v1207 = vadd.f32 0.0, %v1206
        %v1208 = vpop.f32.mrf.mxu0
        %v1209 = vadd.f32 0.0, %v1208
        %v1210 = vpop.f32.mrf.mxu0
        %v1211 = vadd.f32 0.0, %v1210
        %v1212 = vpop.f32.mrf.mxu0
        %v1213 = vadd.f32 0.0, %v1212
        %1214 = vmatprep.mubr.bf16.mxu0 0
        %1215 = vmatmul.mubr.bf16.gmra.mxu0 %v752
        %v1216 = vpop.f32.mrf.mxu0
        %v1217 = vadd.f32 0.0, %v1216
        %v1218 = vpop.f32.mrf.mxu0
        %v1219 = vadd.f32 0.0, %v1218
        %v1220 = vpop.f32.mrf.mxu0
        %v1221 = vadd.f32 0.0, %v1220
        %v1222 = vpop.f32.mrf.mxu0
        %v1223 = vadd.f32 0.0, %v1222
        %1224 = vmatprep.mubr.bf16.mxu0 0
        %1225 = vmatmul.mubr.bf16.gmra.mxu0 %v753
        %v1226 = vpop.f32.mrf.mxu0
        %v1227 = vadd.f32 0.0, %v1226
        %v1228 = vpop.f32.mrf.mxu0
        %v1229 = vadd.f32 0.0, %v1228
        %v1230 = vpop.f32.mrf.mxu0
        %v1231 = vadd.f32 0.0, %v1230
        %v1232 = vpop.f32.mrf.mxu0
        %v1233 = vadd.f32 0.0, %v1232
        %1234 = vmatprep.mubr.bf16.mxu0 0
        %1235 = vmatmul.mubr.bf16.gmra.mxu0 %v754
        %v1236 = vpop.f32.mrf.mxu0
        %v1237 = vadd.f32 0.0, %v1236
        %v1238 = vpop.f32.mrf.mxu0
        %v1239 = vadd.f32 0.0, %v1238
        %v1240 = vpop.f32.mrf.mxu0
        %v1241 = vadd.f32 0.0, %v1240
        %v1242 = vpop.f32.mrf.mxu0
        %v1243 = vadd.f32 0.0, %v1242
        %1244 = vmatprep.mubr.bf16.mxu0 0
        %1245 = vmatmul.mubr.bf16.gmra.mxu0 %v755
        %v1246 = vpop.f32.mrf.mxu0
        %v1247 = vadd.f32 0.0, %v1246
        %v1248 = vpop.f32.mrf.mxu0
        %v1249 = vadd.f32 0.0, %v1248
        %v1250 = vpop.f32.mrf.mxu0
        %v1251 = vadd.f32 0.0, %v1250
        %v1252 = vpop.f32.mrf.mxu0
        %v1253 = vadd.f32 0.0, %v1252
        %1254 = vmatprep.mubr.bf16.mxu0 0
        %1255 = vmatmul.mubr.bf16.gmra.mxu0 %v756
        %v1256 = vpop.f32.mrf.mxu0
        %v1257 = vadd.f32 0.0, %v1256
        %v1258 = vpop.f32.mrf.mxu0
        %v1259 = vadd.f32 0.0, %v1258
        %v1260 = vpop.f32.mrf.mxu0
        %v1261 = vadd.f32 0.0, %v1260
        %v1262 = vpop.f32.mrf.mxu0
        %v1263 = vadd.f32 0.0, %v1262
        %1264 = vmatprep.mubr.bf16.mxu0 0
        %1265 = vmatmul.mubr.bf16.gmra.mxu0 %v757
        %v1266 = vpop.f32.mrf.mxu0
        %v1267 = vadd.f32 0.0, %v1266
        %v1268 = vpop.f32.mrf.mxu0
        %v1269 = vadd.f32 0.0, %v1268
        %v1270 = vpop.f32.mrf.mxu0
        %v1271 = vadd.f32 0.0, %v1270
        %v1272 = vpop.f32.mrf.mxu0
        %v1273 = vadd.f32 0.0, %v1272
        %1274 = vmatprep.mubr.bf16.mxu0 0
        %1275 = vmatmul.mubr.bf16.gmra.mxu0 %v758
        %v1276 = vpop.f32.mrf.mxu0
        %v1277 = vadd.f32 0.0, %v1276
        %v1278 = vpop.f32.mrf.mxu0
        %v1279 = vadd.f32 0.0, %v1278
        %v1280 = vpop.f32.mrf.mxu0
        %v1281 = vadd.f32 0.0, %v1280
        %v1282 = vpop.f32.mrf.mxu0
        %v1283 = vadd.f32 0.0, %v1282
        %1284 = vmatprep.mubr.bf16.mxu0 0
        %1285 = vmatmul.mubr.bf16.gmra.mxu0 %v759
        %v1286 = vpop.f32.mrf.mxu0
        %v1287 = vadd.f32 0.0, %v1286
        %v1288 = vpop.f32.mrf.mxu0
        %v1289 = vadd.f32 0.0, %v1288
        %v1290 = vpop.f32.mrf.mxu0
        %v1291 = vadd.f32 0.0, %v1290
        %v1292 = vpop.f32.mrf.mxu0
        %v1293 = vadd.f32 0.0, %v1292
        %1294 = vmatprep.mubr.bf16.mxu0 0
        %1295 = vmatmul.mubr.bf16.gmra.mxu0 %v760
        %v1296 = vpop.f32.mrf.mxu0
        %v1297 = vadd.f32 0.0, %v1296
        %v1298 = vpop.f32.mrf.mxu0
        %v1299 = vadd.f32 0.0, %v1298
        %v1300 = vpop.f32.mrf.mxu0
        %v1301 = vadd.f32 0.0, %v1300
        %v1302 = vpop.f32.mrf.mxu0
        %v1303 = vadd.f32 0.0, %v1302
        %1304 = vmatprep.mubr.bf16.mxu0 0
        %1305 = vmatmul.mubr.bf16.gmra.mxu0 %v761
        %v1306 = vpop.f32.mrf.mxu0
        %v1307 = vadd.f32 0.0, %v1306
        %v1308 = vpop.f32.mrf.mxu0
        %v1309 = vadd.f32 0.0, %v1308
        %v1310 = vpop.f32.mrf.mxu0
        %v1311 = vadd.f32 0.0, %v1310
        %v1312 = vpop.f32.mrf.mxu0
        %v1313 = vadd.f32 0.0, %v1312
        %1314 = vmatprep.mubr.bf16.mxu0 0
        %1315 = vmatmul.mubr.bf16.gmra.mxu0 %v762
        %v1316 = vpop.f32.mrf.mxu0
        %v1317 = vadd.f32 0.0, %v1316
        %v1318 = vpop.f32.mrf.mxu0
        %v1319 = vadd.f32 0.0, %v1318
        %v1320 = vpop.f32.mrf.mxu0
        %v1321 = vadd.f32 0.0, %v1320
        %v1322 = vpop.f32.mrf.mxu0
        %v1323 = vadd.f32 0.0, %v1322
        %1324 = vdwg.mxu0
        %v1357 = vrot.slane %v976, 1
        %v1358 = vrot.slane %v980, 1
        %v1359 = vrot.slane %v986, 1
        %v1360 = vrot.slane %v990, 1
        %v1361 = vrot.slane %v996, 1
        %v1362 = vrot.slane %v1000, 1
        %v1363 = vrot.slane %v1006, 1
        %v1364 = vrot.slane %v1010, 1
        %v1365 = vrot.slane %v1016, 1
        %v1366 = vrot.slane %v1020, 1
        %v1367 = vrot.slane %v1026, 1
        %v1368 = vrot.slane %v1030, 1
        %v1369 = vrot.slane %v1036, 1
        %v1370 = vrot.slane %v1040, 1
        %v1371 = vrot.slane %v1046, 1
        %v1372 = vrot.slane %v1050, 1
        %v1373 = vrot.slane %v1056, 1
        %v1374 = vrot.slane %v1060, 1
        %v1375 = vrot.slane %v1066, 1
        %v1376 = vrot.slane %v1070, 1
        %v1377 = vrot.slane %v1076, 1
        %v1378 = vrot.slane %v1080, 1
        %v1379 = vrot.slane %v1086, 1
        %v1380 = vrot.slane %v1090, 1
        %v1381 = vrot.slane %v1096, 1
        %v1382 = vrot.slane %v1100, 1
        %v1383 = vrot.slane %v1106, 1
        %v1384 = vrot.slane %v1110, 1
        %v1385 = vrot.slane %v1116, 1
        %v1386 = vrot.slane %v1120, 1
        %v1387 = vrot.slane %v1126, 1
        %v1388 = vrot.slane %v1130, 1
        %v1421 = vadd.f32 %v974, %v1357
        %v1422 = vadd.f32 %v978, %v1358
        %v1423 = vadd.f32 %v984, %v1359
        %v1424 = vadd.f32 %v988, %v1360
        %v1425 = vadd.f32 %v994, %v1361
        %v1426 = vadd.f32 %v998, %v1362
        %v1427 = vadd.f32 %v1004, %v1363
        %v1428 = vadd.f32 %v1008, %v1364
        %v1429 = vadd.f32 %v1014, %v1365
        %v1430 = vadd.f32 %v1018, %v1366
        %v1431 = vadd.f32 %v1024, %v1367
        %v1432 = vadd.f32 %v1028, %v1368
        %v1433 = vadd.f32 %v1034, %v1369
        %v1434 = vadd.f32 %v1038, %v1370
        %v1435 = vadd.f32 %v1044, %v1371
        %v1436 = vadd.f32 %v1048, %v1372
        %v1437 = vadd.f32 %v1054, %v1373
        %v1438 = vadd.f32 %v1058, %v1374
        %v1439 = vadd.f32 %v1064, %v1375
        %v1440 = vadd.f32 %v1068, %v1376
        %v1441 = vadd.f32 %v1074, %v1377
        %v1442 = vadd.f32 %v1078, %v1378
        %v1443 = vadd.f32 %v1084, %v1379
        %v1444 = vadd.f32 %v1088, %v1380
        %v1445 = vadd.f32 %v1094, %v1381
        %v1446 = vadd.f32 %v1098, %v1382
        %v1447 = vadd.f32 %v1104, %v1383
        %v1448 = vadd.f32 %v1108, %v1384
        %v1449 = vadd.f32 %v1114, %v1385
        %v1450 = vadd.f32 %v1118, %v1386
        %v1451 = vadd.f32 %v1124, %v1387
        %v1452 = vadd.f32 %v1128, %v1388
        %vm1453 = vcmask 1046528
        %v1454 = vsel %vm1453, %v1421, -inf
        %v1455 = vrot.slane %v1454, 4
        %v1456 = vmax.f32 %v1454, %v1455
        %v1457 = vrot.slane %v1456, 2
        %v1458 = vmax.f32 %v1456, %v1457
        %v1459 = vrot.slane %v1458, 1
        %v1460 = vmax.f32 %v1458, %v1459
        %v1461 = vsel %vm1453, %v1422, -inf
        %v1462 = vrot.slane %v1461, 4
        %v1463 = vmax.f32 %v1461, %v1462
        %v1464 = vrot.slane %v1463, 2
        %v1465 = vmax.f32 %v1463, %v1464
        %v1466 = vrot.slane %v1465, 1
        %v1467 = vmax.f32 %v1465, %v1466
        %v1468 = vsel %vm1453, %v1423, -inf
        %v1469 = vrot.slane %v1468, 4
        %v1470 = vmax.f32 %v1468, %v1469
        %v1471 = vrot.slane %v1470, 2
        %v1472 = vmax.f32 %v1470, %v1471
        %v1473 = vrot.slane %v1472, 1
        %v1474 = vmax.f32 %v1472, %v1473
        %v1475 = vsel %vm1453, %v1424, -inf
        %v1476 = vrot.slane %v1475, 4
        %v1477 = vmax.f32 %v1475, %v1476
        %v1478 = vrot.slane %v1477, 2
        %v1479 = vmax.f32 %v1477, %v1478
        %v1480 = vrot.slane %v1479, 1
        %v1481 = vmax.f32 %v1479, %v1480
        %v1482 = vsel %vm1453, %v1425, -inf
        %v1483 = vrot.slane %v1482, 4
        %v1484 = vmax.f32 %v1482, %v1483
        %v1485 = vrot.slane %v1484, 2
        %v1486 = vmax.f32 %v1484, %v1485
        %v1487 = vrot.slane %v1486, 1
        %v1488 = vmax.f32 %v1486, %v1487
        %v1489 = vsel %vm1453, %v1426, -inf
        %v1490 = vrot.slane %v1489, 4
        %v1491 = vmax.f32 %v1489, %v1490
        %v1492 = vrot.slane %v1491, 2
        %v1493 = vmax.f32 %v1491, %v1492
        %v1494 = vrot.slane %v1493, 1
        %v1495 = vmax.f32 %v1493, %v1494
        %v1496 = vsel %vm1453, %v1427, -inf
        %v1497 = vrot.slane %v1496, 4
        %v1498 = vmax.f32 %v1496, %v1497
        %v1499 = vrot.slane %v1498, 2
        %v1500 = vmax.f32 %v1498, %v1499
        %v1501 = vrot.slane %v1500, 1
        %v1502 = vmax.f32 %v1500, %v1501
        %v1503 = vsel %vm1453, %v1428, -inf
        %v1504 = vrot.slane %v1503, 4
        %v1505 = vmax.f32 %v1503, %v1504
        %v1506 = vrot.slane %v1505, 2
        %v1507 = vmax.f32 %v1505, %v1506
        %v1508 = vrot.slane %v1507, 1
        %v1509 = vmax.f32 %v1507, %v1508
        %v1510 = vsel %vm1453, %v1429, -inf
        %v1511 = vrot.slane %v1510, 4
        %v1512 = vmax.f32 %v1510, %v1511
        %v1513 = vrot.slane %v1512, 2
        %v1514 = vmax.f32 %v1512, %v1513
        %v1515 = vrot.slane %v1514, 1
        %v1516 = vmax.f32 %v1514, %v1515
        %v1517 = vsel %vm1453, %v1430, -inf
        %v1518 = vrot.slane %v1517, 4
        %v1519 = vmax.f32 %v1517, %v1518
        %v1520 = vrot.slane %v1519, 2
        %v1521 = vmax.f32 %v1519, %v1520
        %v1522 = vrot.slane %v1521, 1
        %v1523 = vmax.f32 %v1521, %v1522
        %v1524 = vsel %vm1453, %v1431, -inf
        %v1525 = vrot.slane %v1524, 4
        %v1526 = vmax.f32 %v1524, %v1525
        %v1527 = vrot.slane %v1526, 2
        %v1528 = vmax.f32 %v1526, %v1527
        %v1529 = vrot.slane %v1528, 1
        %v1530 = vmax.f32 %v1528, %v1529
        %v1531 = vsel %vm1453, %v1432, -inf
        %v1532 = vrot.slane %v1531, 4
        %v1533 = vmax.f32 %v1531, %v1532
        %v1534 = vrot.slane %v1533, 2
        %v1535 = vmax.f32 %v1533, %v1534
        %v1536 = vrot.slane %v1535, 1
        %v1537 = vmax.f32 %v1535, %v1536
        %v1538 = vsel %vm1453, %v1433, -inf
        %v1539 = vrot.slane %v1538, 4
        %v1540 = vmax.f32 %v1538, %v1539
        %v1541 = vrot.slane %v1540, 2
        %v1542 = vmax.f32 %v1540, %v1541
        %v1543 = vrot.slane %v1542, 1
        %v1544 = vmax.f32 %v1542, %v1543
        %v1545 = vsel %vm1453, %v1434, -inf
        %v1546 = vrot.slane %v1545, 4
        %v1547 = vmax.f32 %v1545, %v1546
        %v1548 = vrot.slane %v1547, 2
        %v1549 = vmax.f32 %v1547, %v1548
        %v1550 = vrot.slane %v1549, 1
        %v1551 = vmax.f32 %v1549, %v1550
        %v1552 = vsel %vm1453, %v1435, -inf
        %v1553 = vrot.slane %v1552, 4
        %v1554 = vmax.f32 %v1552, %v1553
        %v1555 = vrot.slane %v1554, 2
        %v1556 = vmax.f32 %v1554, %v1555
        %v1557 = vrot.slane %v1556, 1
        %v1558 = vmax.f32 %v1556, %v1557
        %v1559 = vsel %vm1453, %v1436, -inf
        %v1560 = vrot.slane %v1559, 4
        %v1561 = vmax.f32 %v1559, %v1560
        %v1562 = vrot.slane %v1561, 2
        %v1563 = vmax.f32 %v1561, %v1562
        %v1564 = vrot.slane %v1563, 1
        %v1565 = vmax.f32 %v1563, %v1564
        %v1566 = vsel %vm1453, %v1437, -inf
        %v1567 = vrot.slane %v1566, 4
        %v1568 = vmax.f32 %v1566, %v1567
        %v1569 = vrot.slane %v1568, 2
        %v1570 = vmax.f32 %v1568, %v1569
        %v1571 = vrot.slane %v1570, 1
        %v1572 = vmax.f32 %v1570, %v1571
        %v1573 = vsel %vm1453, %v1438, -inf
        %v1574 = vrot.slane %v1573, 4
        %v1575 = vmax.f32 %v1573, %v1574
        %v1576 = vrot.slane %v1575, 2
        %v1577 = vmax.f32 %v1575, %v1576
        %v1578 = vrot.slane %v1577, 1
        %v1579 = vmax.f32 %v1577, %v1578
        %v1580 = vsel %vm1453, %v1439, -inf
        %v1581 = vrot.slane %v1580, 4
        %v1582 = vmax.f32 %v1580, %v1581
        %v1583 = vrot.slane %v1582, 2
        %v1584 = vmax.f32 %v1582, %v1583
        %v1585 = vrot.slane %v1584, 1
        %v1586 = vmax.f32 %v1584, %v1585
        %v1587 = vsel %vm1453, %v1440, -inf
        %v1588 = vrot.slane %v1587, 4
        %v1589 = vmax.f32 %v1587, %v1588
        %v1590 = vrot.slane %v1589, 2
        %v1591 = vmax.f32 %v1589, %v1590
        %v1592 = vrot.slane %v1591, 1
        %v1593 = vmax.f32 %v1591, %v1592
        %v1594 = vsel %vm1453, %v1441, -inf
        %v1595 = vrot.slane %v1594, 4
        %v1596 = vmax.f32 %v1594, %v1595
        %v1597 = vrot.slane %v1596, 2
        %v1598 = vmax.f32 %v1596, %v1597
        %v1599 = vrot.slane %v1598, 1
        %v1600 = vmax.f32 %v1598, %v1599
        %v1601 = vsel %vm1453, %v1442, -inf
        %v1602 = vrot.slane %v1601, 4
        %v1603 = vmax.f32 %v1601, %v1602
        %v1604 = vrot.slane %v1603, 2
        %v1605 = vmax.f32 %v1603, %v1604
        %v1606 = vrot.slane %v1605, 1
        %v1607 = vmax.f32 %v1605, %v1606
        %v1608 = vsel %vm1453, %v1443, -inf
        %v1609 = vrot.slane %v1608, 4
        %v1610 = vmax.f32 %v1608, %v1609
        %v1611 = vrot.slane %v1610, 2
        %v1612 = vmax.f32 %v1610, %v1611
        %v1613 = vrot.slane %v1612, 1
        %v1614 = vmax.f32 %v1612, %v1613
        %v1615 = vsel %vm1453, %v1444, -inf
        %v1616 = vrot.slane %v1615, 4
        %v1617 = vmax.f32 %v1615, %v1616
        %v1618 = vrot.slane %v1617, 2
        %v1619 = vmax.f32 %v1617, %v1618
        %v1620 = vrot.slane %v1619, 1
        %v1621 = vmax.f32 %v1619, %v1620
        %v1622 = vsel %vm1453, %v1445, -inf
        %v1623 = vrot.slane %v1622, 4
        %v1624 = vmax.f32 %v1622, %v1623
        %v1625 = vrot.slane %v1624, 2
        %v1626 = vmax.f32 %v1624, %v1625
        %v1627 = vrot.slane %v1626, 1
        %v1628 = vmax.f32 %v1626, %v1627
        %v1629 = vsel %vm1453, %v1446, -inf
        %v1630 = vrot.slane %v1629, 4
        %v1631 = vmax.f32 %v1629, %v1630
        %v1632 = vrot.slane %v1631, 2
        %v1633 = vmax.f32 %v1631, %v1632
        %v1634 = vrot.slane %v1633, 1
        %v1635 = vmax.f32 %v1633, %v1634
        %v1636 = vsel %vm1453, %v1447, -inf
        %v1637 = vrot.slane %v1636, 4
        %v1638 = vmax.f32 %v1636, %v1637
        %v1639 = vrot.slane %v1638, 2
        %v1640 = vmax.f32 %v1638, %v1639
        %v1641 = vrot.slane %v1640, 1
        %v1642 = vmax.f32 %v1640, %v1641
        %v1643 = vsel %vm1453, %v1448, -inf
        %v1644 = vrot.slane %v1643, 4
        %v1645 = vmax.f32 %v1643, %v1644
        %v1646 = vrot.slane %v1645, 2
        %v1647 = vmax.f32 %v1645, %v1646
        %v1648 = vrot.slane %v1647, 1
        %v1649 = vmax.f32 %v1647, %v1648
        %v1650 = vsel %vm1453, %v1449, -inf
        %v1651 = vrot.slane %v1650, 4
        %v1652 = vmax.f32 %v1650, %v1651
        %v1653 = vrot.slane %v1652, 2
        %v1654 = vmax.f32 %v1652, %v1653
        %v1655 = vrot.slane %v1654, 1
        %v1656 = vmax.f32 %v1654, %v1655
        %v1657 = vsel %vm1453, %v1450, -inf
        %v1658 = vrot.slane %v1657, 4
        %v1659 = vmax.f32 %v1657, %v1658
        %v1660 = vrot.slane %v1659, 2
        %v1661 = vmax.f32 %v1659, %v1660
        %v1662 = vrot.slane %v1661, 1
        %v1663 = vmax.f32 %v1661, %v1662
        %v1664 = vsel %vm1453, %v1451, -inf
        %v1665 = vrot.slane %v1664, 4
        %v1666 = vmax.f32 %v1664, %v1665
        %v1667 = vrot.slane %v1666, 2
        %v1668 = vmax.f32 %v1666, %v1667
        %v1669 = vrot.slane %v1668, 1
        %v1670 = vmax.f32 %v1668, %v1669
        %v1671 = vsel %vm1453, %v1452, -inf
        %v1672 = vrot.slane %v1671, 4
        %v1673 = vmax.f32 %v1671, %v1672
        %v1674 = vrot.slane %v1673, 2
        %v1675 = vmax.f32 %v1673, %v1674
        %v1676 = vrot.slane %v1675, 1
        %v1677 = vmax.f32 %v1675, %v1676
        %vm1678 = vcmp.ge.s32.totalorder %v330, 0
        %vm1679 = vcmp.lt.s32.totalorder %v330, 8
        %vm1680 = vmand %vm1678, %vm1679
        %vm1713 = vcmask 1041409
        %v1714 = vsel %vm1713, %v1467, %v1460
        %vm1715 = vcmask 1042434
        %v1716 = vsel %vm1715, %v1474, %v1714
        %vm1717 = vcmask 1043459
        %v1718 = vsel %vm1717, %v1481, %v1716
        %vm1719 = vcmask 1044484
        %v1720 = vsel %vm1719, %v1488, %v1718
        %vm1721 = vcmask 1045509
        %v1722 = vsel %vm1721, %v1495, %v1720
        %vm1723 = vcmask 1046534
        %v1724 = vsel %vm1723, %v1502, %v1722
        %vm1725 = vcmask 1047559
        %v1726 = vsel %vm1725, %v1509, %v1724
        %v1727 = vsel %vm1713, %v1523, %v1516
        %v1728 = vsel %vm1715, %v1530, %v1727
        %v1729 = vsel %vm1717, %v1537, %v1728
        %v1730 = vsel %vm1719, %v1544, %v1729
        %v1731 = vsel %vm1721, %v1551, %v1730
        %v1732 = vsel %vm1723, %v1558, %v1731
        %v1733 = vsel %vm1725, %v1565, %v1732
        %v1734 = vsel %vm1713, %v1579, %v1572
        %v1735 = vsel %vm1715, %v1586, %v1734
        %v1736 = vsel %vm1717, %v1593, %v1735
        %v1737 = vsel %vm1719, %v1600, %v1736
        %v1738 = vsel %vm1721, %v1607, %v1737
        %v1739 = vsel %vm1723, %v1614, %v1738
        %v1740 = vsel %vm1725, %v1621, %v1739
        %v1741 = vsel %vm1713, %v1635, %v1628
        %v1742 = vsel %vm1715, %v1642, %v1741
        %v1743 = vsel %vm1717, %v1649, %v1742
        %v1744 = vsel %vm1719, %v1656, %v1743
        %v1745 = vsel %vm1721, %v1663, %v1744
        %v1746 = vsel %vm1723, %v1670, %v1745
        %v1747 = vsel %vm1725, %v1677, %v1746
        %v1752 = vsel %vm1680, %v1726, 0.0
        %v1753 = vsel %vm1680, %v1733, 0.0
        %v1754 = vsel %vm1680, %v1740, 0.0
        %v1755 = vsel %vm1680, %v1747, 0.0
        %v1788 = vrot.slane %v1167, 2
        %v1789 = vrot.slane %v1171, 2
        %v1790 = vrot.slane %v1177, 2
        %v1791 = vrot.slane %v1181, 2
        %v1792 = vrot.slane %v1187, 2
        %v1793 = vrot.slane %v1191, 2
        %v1794 = vrot.slane %v1197, 2
        %v1795 = vrot.slane %v1201, 2
        %v1796 = vrot.slane %v1207, 2
        %v1797 = vrot.slane %v1211, 2
        %v1798 = vrot.slane %v1217, 2
        %v1799 = vrot.slane %v1221, 2
        %v1800 = vrot.slane %v1227, 2
        %v1801 = vrot.slane %v1231, 2
        %v1802 = vrot.slane %v1237, 2
        %v1803 = vrot.slane %v1241, 2
        %v1804 = vrot.slane %v1247, 2
        %v1805 = vrot.slane %v1251, 2
        %v1806 = vrot.slane %v1257, 2
        %v1807 = vrot.slane %v1261, 2
        %v1808 = vrot.slane %v1267, 2
        %v1809 = vrot.slane %v1271, 2
        %v1810 = vrot.slane %v1277, 2
        %v1811 = vrot.slane %v1281, 2
        %v1812 = vrot.slane %v1287, 2
        %v1813 = vrot.slane %v1291, 2
        %v1814 = vrot.slane %v1297, 2
        %v1815 = vrot.slane %v1301, 2
        %v1816 = vrot.slane %v1307, 2
        %v1817 = vrot.slane %v1311, 2
        %v1818 = vrot.slane %v1317, 2
        %v1819 = vrot.slane %v1321, 2
        %v1852 = vadd.f32 %v1421, %v1788
        %v1853 = vadd.f32 %v1422, %v1789
        %v1854 = vadd.f32 %v1423, %v1790
        %v1855 = vadd.f32 %v1424, %v1791
        %v1856 = vadd.f32 %v1425, %v1792
        %v1857 = vadd.f32 %v1426, %v1793
        %v1858 = vadd.f32 %v1427, %v1794
        %v1859 = vadd.f32 %v1428, %v1795
        %v1860 = vadd.f32 %v1429, %v1796
        %v1861 = vadd.f32 %v1430, %v1797
        %v1862 = vadd.f32 %v1431, %v1798
        %v1863 = vadd.f32 %v1432, %v1799
        %v1864 = vadd.f32 %v1433, %v1800
        %v1865 = vadd.f32 %v1434, %v1801
        %v1866 = vadd.f32 %v1435, %v1802
        %v1867 = vadd.f32 %v1436, %v1803
        %v1868 = vadd.f32 %v1437, %v1804
        %v1869 = vadd.f32 %v1438, %v1805
        %v1870 = vadd.f32 %v1439, %v1806
        %v1871 = vadd.f32 %v1440, %v1807
        %v1872 = vadd.f32 %v1441, %v1808
        %v1873 = vadd.f32 %v1442, %v1809
        %v1874 = vadd.f32 %v1443, %v1810
        %v1875 = vadd.f32 %v1444, %v1811
        %v1876 = vadd.f32 %v1445, %v1812
        %v1877 = vadd.f32 %v1446, %v1813
        %v1878 = vadd.f32 %v1447, %v1814
        %v1879 = vadd.f32 %v1448, %v1815
        %v1880 = vadd.f32 %v1449, %v1816
        %v1881 = vadd.f32 %v1450, %v1817
        %v1882 = vadd.f32 %v1451, %v1818
        %v1883 = vadd.f32 %v1452, %v1819
        %vm1884 = vcmask 1045504
        %v1885 = vsel %vm1884, %v1852, -inf
        %v1886 = vrot.slane %v1885, 4
        %v1887 = vmax.f32 %v1885, %v1886
        %v1888 = vrot.slane %v1887, 2
        %v1889 = vmax.f32 %v1887, %v1888
        %v1890 = vrot.slane %v1889, 1
        %v1891 = vmax.f32 %v1889, %v1890
        %v1892 = vsel %vm1884, %v1853, -inf
        %v1893 = vrot.slane %v1892, 4
        %v1894 = vmax.f32 %v1892, %v1893
        %v1895 = vrot.slane %v1894, 2
        %v1896 = vmax.f32 %v1894, %v1895
        %v1897 = vrot.slane %v1896, 1
        %v1898 = vmax.f32 %v1896, %v1897
        %v1899 = vsel %vm1884, %v1854, -inf
        %v1900 = vrot.slane %v1899, 4
        %v1901 = vmax.f32 %v1899, %v1900
        %v1902 = vrot.slane %v1901, 2
        %v1903 = vmax.f32 %v1901, %v1902
        %v1904 = vrot.slane %v1903, 1
        %v1905 = vmax.f32 %v1903, %v1904
        %v1906 = vsel %vm1884, %v1855, -inf
        %v1907 = vrot.slane %v1906, 4
        %v1908 = vmax.f32 %v1906, %v1907
        %v1909 = vrot.slane %v1908, 2
        %v1910 = vmax.f32 %v1908, %v1909
        %v1911 = vrot.slane %v1910, 1
        %v1912 = vmax.f32 %v1910, %v1911
        %v1913 = vsel %vm1884, %v1856, -inf
        %v1914 = vrot.slane %v1913, 4
        %v1915 = vmax.f32 %v1913, %v1914
        %v1916 = vrot.slane %v1915, 2
        %v1917 = vmax.f32 %v1915, %v1916
        %v1918 = vrot.slane %v1917, 1
        %v1919 = vmax.f32 %v1917, %v1918
        %v1920 = vsel %vm1884, %v1857, -inf
        %v1921 = vrot.slane %v1920, 4
        %v1922 = vmax.f32 %v1920, %v1921
        %v1923 = vrot.slane %v1922, 2
        %v1924 = vmax.f32 %v1922, %v1923
        %v1925 = vrot.slane %v1924, 1
        %v1926 = vmax.f32 %v1924, %v1925
        %v1927 = vsel %vm1884, %v1858, -inf
        %v1928 = vrot.slane %v1927, 4
        %v1929 = vmax.f32 %v1927, %v1928
        %v1930 = vrot.slane %v1929, 2
        %v1931 = vmax.f32 %v1929, %v1930
        %v1932 = vrot.slane %v1931, 1
        %v1933 = vmax.f32 %v1931, %v1932
        %v1934 = vsel %vm1884, %v1859, -inf
        %v1935 = vrot.slane %v1934, 4
        %v1936 = vmax.f32 %v1934, %v1935
        %v1937 = vrot.slane %v1936, 2
        %v1938 = vmax.f32 %v1936, %v1937
        %v1939 = vrot.slane %v1938, 1
        %v1940 = vmax.f32 %v1938, %v1939
        %v1941 = vsel %vm1884, %v1860, -inf
        %v1942 = vrot.slane %v1941, 4
        %v1943 = vmax.f32 %v1941, %v1942
        %v1944 = vrot.slane %v1943, 2
        %v1945 = vmax.f32 %v1943, %v1944
        %v1946 = vrot.slane %v1945, 1
        %v1947 = vmax.f32 %v1945, %v1946
        %v1948 = vsel %vm1884, %v1861, -inf
        %v1949 = vrot.slane %v1948, 4
        %v1950 = vmax.f32 %v1948, %v1949
        %v1951 = vrot.slane %v1950, 2
        %v1952 = vmax.f32 %v1950, %v1951
        %v1953 = vrot.slane %v1952, 1
        %v1954 = vmax.f32 %v1952, %v1953
        %v1955 = vsel %vm1884, %v1862, -inf
        %v1956 = vrot.slane %v1955, 4
        %v1957 = vmax.f32 %v1955, %v1956
        %v1958 = vrot.slane %v1957, 2
        %v1959 = vmax.f32 %v1957, %v1958
        %v1960 = vrot.slane %v1959, 1
        %v1961 = vmax.f32 %v1959, %v1960
        %v1962 = vsel %vm1884, %v1863, -inf
        %v1963 = vrot.slane %v1962, 4
        %v1964 = vmax.f32 %v1962, %v1963
        %v1965 = vrot.slane %v1964, 2
        %v1966 = vmax.f32 %v1964, %v1965
        %v1967 = vrot.slane %v1966, 1
        %v1968 = vmax.f32 %v1966, %v1967
        %v1969 = vsel %vm1884, %v1864, -inf
        %v1970 = vrot.slane %v1969, 4
        %v1971 = vmax.f32 %v1969, %v1970
        %v1972 = vrot.slane %v1971, 2
        %v1973 = vmax.f32 %v1971, %v1972
        %v1974 = vrot.slane %v1973, 1
        %v1975 = vmax.f32 %v1973, %v1974
        %v1976 = vsel %vm1884, %v1865, -inf
        %v1977 = vrot.slane %v1976, 4
        %v1978 = vmax.f32 %v1976, %v1977
        %v1979 = vrot.slane %v1978, 2
        %v1980 = vmax.f32 %v1978, %v1979
        %v1981 = vrot.slane %v1980, 1
        %v1982 = vmax.f32 %v1980, %v1981
        %v1983 = vsel %vm1884, %v1866, -inf
        %v1984 = vrot.slane %v1983, 4
        %v1985 = vmax.f32 %v1983, %v1984
        %v1986 = vrot.slane %v1985, 2
        %v1987 = vmax.f32 %v1985, %v1986
        %v1988 = vrot.slane %v1987, 1
        %v1989 = vmax.f32 %v1987, %v1988
        %v1990 = vsel %vm1884, %v1867, -inf
        %v1991 = vrot.slane %v1990, 4
        %v1992 = vmax.f32 %v1990, %v1991
        %v1993 = vrot.slane %v1992, 2
        %v1994 = vmax.f32 %v1992, %v1993
        %v1995 = vrot.slane %v1994, 1
        %v1996 = vmax.f32 %v1994, %v1995
        %v1997 = vsel %vm1884, %v1868, -inf
        %v1998 = vrot.slane %v1997, 4
        %v1999 = vmax.f32 %v1997, %v1998
        %v2000 = vrot.slane %v1999, 2
        %v2001 = vmax.f32 %v1999, %v2000
        %v2002 = vrot.slane %v2001, 1
        %v2003 = vmax.f32 %v2001, %v2002
        %v2004 = vsel %vm1884, %v1869, -inf
        %v2005 = vrot.slane %v2004, 4
        %v2006 = vmax.f32 %v2004, %v2005
        %v2007 = vrot.slane %v2006, 2
        %v2008 = vmax.f32 %v2006, %v2007
        %v2009 = vrot.slane %v2008, 1
        %v2010 = vmax.f32 %v2008, %v2009
        %v2011 = vsel %vm1884, %v1870, -inf
        %v2012 = vrot.slane %v2011, 4
        %v2013 = vmax.f32 %v2011, %v2012
        %v2014 = vrot.slane %v2013, 2
        %v2015 = vmax.f32 %v2013, %v2014
        %v2016 = vrot.slane %v2015, 1
        %v2017 = vmax.f32 %v2015, %v2016
        %v2018 = vsel %vm1884, %v1871, -inf
        %v2019 = vrot.slane %v2018, 4
        %v2020 = vmax.f32 %v2018, %v2019
        %v2021 = vrot.slane %v2020, 2
        %v2022 = vmax.f32 %v2020, %v2021
        %v2023 = vrot.slane %v2022, 1
        %v2024 = vmax.f32 %v2022, %v2023
        %v2025 = vsel %vm1884, %v1872, -inf
        %v2026 = vrot.slane %v2025, 4
        %v2027 = vmax.f32 %v2025, %v2026
        %v2028 = vrot.slane %v2027, 2
        %v2029 = vmax.f32 %v2027, %v2028
        %v2030 = vrot.slane %v2029, 1
        %v2031 = vmax.f32 %v2029, %v2030
        %v2032 = vsel %vm1884, %v1873, -inf
        %v2033 = vrot.slane %v2032, 4
        %v2034 = vmax.f32 %v2032, %v2033
        %v2035 = vrot.slane %v2034, 2
        %v2036 = vmax.f32 %v2034, %v2035
        %v2037 = vrot.slane %v2036, 1
        %v2038 = vmax.f32 %v2036, %v2037
        %v2039 = vsel %vm1884, %v1874, -inf
        %v2040 = vrot.slane %v2039, 4
        %v2041 = vmax.f32 %v2039, %v2040
        %v2042 = vrot.slane %v2041, 2
        %v2043 = vmax.f32 %v2041, %v2042
        %v2044 = vrot.slane %v2043, 1
        %v2045 = vmax.f32 %v2043, %v2044
        %v2046 = vsel %vm1884, %v1875, -inf
        %v2047 = vrot.slane %v2046, 4
        %v2048 = vmax.f32 %v2046, %v2047
        %v2049 = vrot.slane %v2048, 2
        %v2050 = vmax.f32 %v2048, %v2049
        %v2051 = vrot.slane %v2050, 1
        %v2052 = vmax.f32 %v2050, %v2051
        %v2053 = vsel %vm1884, %v1876, -inf
        %v2054 = vrot.slane %v2053, 4
        %v2055 = vmax.f32 %v2053, %v2054
        %v2056 = vrot.slane %v2055, 2
        %v2057 = vmax.f32 %v2055, %v2056
        %v2058 = vrot.slane %v2057, 1
        %v2059 = vmax.f32 %v2057, %v2058
        %v2060 = vsel %vm1884, %v1877, -inf
        %v2061 = vrot.slane %v2060, 4
        %v2062 = vmax.f32 %v2060, %v2061
        %v2063 = vrot.slane %v2062, 2
        %v2064 = vmax.f32 %v2062, %v2063
        %v2065 = vrot.slane %v2064, 1
        %v2066 = vmax.f32 %v2064, %v2065
        %v2067 = vsel %vm1884, %v1878, -inf
        %v2068 = vrot.slane %v2067, 4
        %v2069 = vmax.f32 %v2067, %v2068
        %v2070 = vrot.slane %v2069, 2
        %v2071 = vmax.f32 %v2069, %v2070
        %v2072 = vrot.slane %v2071, 1
        %v2073 = vmax.f32 %v2071, %v2072
        %v2074 = vsel %vm1884, %v1879, -inf
        %v2075 = vrot.slane %v2074, 4
        %v2076 = vmax.f32 %v2074, %v2075
        %v2077 = vrot.slane %v2076, 2
        %v2078 = vmax.f32 %v2076, %v2077
        %v2079 = vrot.slane %v2078, 1
        %v2080 = vmax.f32 %v2078, %v2079
        %v2081 = vsel %vm1884, %v1880, -inf
        %v2082 = vrot.slane %v2081, 4
        %v2083 = vmax.f32 %v2081, %v2082
        %v2084 = vrot.slane %v2083, 2
        %v2085 = vmax.f32 %v2083, %v2084
        %v2086 = vrot.slane %v2085, 1
        %v2087 = vmax.f32 %v2085, %v2086
        %v2088 = vsel %vm1884, %v1881, -inf
        %v2089 = vrot.slane %v2088, 4
        %v2090 = vmax.f32 %v2088, %v2089
        %v2091 = vrot.slane %v2090, 2
        %v2092 = vmax.f32 %v2090, %v2091
        %v2093 = vrot.slane %v2092, 1
        %v2094 = vmax.f32 %v2092, %v2093
        %v2095 = vsel %vm1884, %v1882, -inf
        %v2096 = vrot.slane %v2095, 4
        %v2097 = vmax.f32 %v2095, %v2096
        %v2098 = vrot.slane %v2097, 2
        %v2099 = vmax.f32 %v2097, %v2098
        %v2100 = vrot.slane %v2099, 1
        %v2101 = vmax.f32 %v2099, %v2100
        %v2102 = vsel %vm1884, %v1883, -inf
        %v2103 = vrot.slane %v2102, 4
        %v2104 = vmax.f32 %v2102, %v2103
        %v2105 = vrot.slane %v2104, 2
        %v2106 = vmax.f32 %v2104, %v2105
        %v2107 = vrot.slane %v2106, 1
        %v2108 = vmax.f32 %v2106, %v2107
        %vm2109 = vcmp.ge.s32.totalorder %v330, 8
        %vm2110 = vcmp.lt.s32.totalorder %v330, 16
        %vm2111 = vmand %vm2109, %vm2110
        %v2144 = vsel %vm1713, %v1898, %v1891
        %v2145 = vsel %vm1715, %v1905, %v2144
        %v2146 = vsel %vm1717, %v1912, %v2145
        %v2147 = vsel %vm1719, %v1919, %v2146
        %v2148 = vsel %vm1721, %v1926, %v2147
        %v2149 = vsel %vm1723, %v1933, %v2148
        %v2150 = vsel %vm1725, %v1940, %v2149
        %v2151 = vsel %vm1713, %v1954, %v1947
        %v2152 = vsel %vm1715, %v1961, %v2151
        %v2153 = vsel %vm1717, %v1968, %v2152
        %v2154 = vsel %vm1719, %v1975, %v2153
        %v2155 = vsel %vm1721, %v1982, %v2154
        %v2156 = vsel %vm1723, %v1989, %v2155
        %v2157 = vsel %vm1725, %v1996, %v2156
        %v2158 = vsel %vm1713, %v2010, %v2003
        %v2159 = vsel %vm1715, %v2017, %v2158
        %v2160 = vsel %vm1717, %v2024, %v2159
        %v2161 = vsel %vm1719, %v2031, %v2160
        %v2162 = vsel %vm1721, %v2038, %v2161
        %v2163 = vsel %vm1723, %v2045, %v2162
        %v2164 = vsel %vm1725, %v2052, %v2163
        %v2165 = vsel %vm1713, %v2066, %v2059
        %v2166 = vsel %vm1715, %v2073, %v2165
        %v2167 = vsel %vm1717, %v2080, %v2166
        %v2168 = vsel %vm1719, %v2087, %v2167
        %v2169 = vsel %vm1721, %v2094, %v2168
        %v2170 = vsel %vm1723, %v2101, %v2169
        %v2171 = vsel %vm1725, %v2108, %v2170
        %v2176 = vsel %vm2111, %v2150, %v1752
        %v2177 = vsel %vm2111, %v2157, %v1753
        %v2178 = vsel %vm2111, %v2164, %v1754
        %v2179 = vsel %vm2111, %v2171, %v1755
        %v2212 = vrot.slane %v1169, 3
        %v2213 = vrot.slane %v1173, 3
        %v2214 = vrot.slane %v1179, 3
        %v2215 = vrot.slane %v1183, 3
        %v2216 = vrot.slane %v1189, 3
        %v2217 = vrot.slane %v1193, 3
        %v2218 = vrot.slane %v1199, 3
        %v2219 = vrot.slane %v1203, 3
        %v2220 = vrot.slane %v1209, 3
        %v2221 = vrot.slane %v1213, 3
        %v2222 = vrot.slane %v1219, 3
        %v2223 = vrot.slane %v1223, 3
        %v2224 = vrot.slane %v1229, 3
        %v2225 = vrot.slane %v1233, 3
        %v2226 = vrot.slane %v1239, 3
        %v2227 = vrot.slane %v1243, 3
        %v2228 = vrot.slane %v1249, 3
        %v2229 = vrot.slane %v1253, 3
        %v2230 = vrot.slane %v1259, 3
        %v2231 = vrot.slane %v1263, 3
        %v2232 = vrot.slane %v1269, 3
        %v2233 = vrot.slane %v1273, 3
        %v2234 = vrot.slane %v1279, 3
        %v2235 = vrot.slane %v1283, 3
        %v2236 = vrot.slane %v1289, 3
        %v2237 = vrot.slane %v1293, 3
        %v2238 = vrot.slane %v1299, 3
        %v2239 = vrot.slane %v1303, 3
        %v2240 = vrot.slane %v1309, 3
        %v2241 = vrot.slane %v1313, 3
        %v2242 = vrot.slane %v1319, 3
        %v2243 = vrot.slane %v1323, 3
        %v2276 = vadd.f32 %v1852, %v2212
        %v2277 = vadd.f32 %v1853, %v2213
        %v2278 = vadd.f32 %v1854, %v2214
        %v2279 = vadd.f32 %v1855, %v2215
        %v2280 = vadd.f32 %v1856, %v2216
        %v2281 = vadd.f32 %v1857, %v2217
        %v2282 = vadd.f32 %v1858, %v2218
        %v2283 = vadd.f32 %v1859, %v2219
        %v2284 = vadd.f32 %v1860, %v2220
        %v2285 = vadd.f32 %v1861, %v2221
        %v2286 = vadd.f32 %v1862, %v2222
        %v2287 = vadd.f32 %v1863, %v2223
        %v2288 = vadd.f32 %v1864, %v2224
        %v2289 = vadd.f32 %v1865, %v2225
        %v2290 = vadd.f32 %v1866, %v2226
        %v2291 = vadd.f32 %v1867, %v2227
        %v2292 = vadd.f32 %v1868, %v2228
        %v2293 = vadd.f32 %v1869, %v2229
        %v2294 = vadd.f32 %v1870, %v2230
        %v2295 = vadd.f32 %v1871, %v2231
        %v2296 = vadd.f32 %v1872, %v2232
        %v2297 = vadd.f32 %v1873, %v2233
        %v2298 = vadd.f32 %v1874, %v2234
        %v2299 = vadd.f32 %v1875, %v2235
        %v2300 = vadd.f32 %v1876, %v2236
        %v2301 = vadd.f32 %v1877, %v2237
        %v2302 = vadd.f32 %v1878, %v2238
        %v2303 = vadd.f32 %v1879, %v2239
        %v2304 = vadd.f32 %v1880, %v2240
        %v2305 = vadd.f32 %v1881, %v2241
        %v2306 = vadd.f32 %v1882, %v2242
        %v2307 = vadd.f32 %v1883, %v2243
        %vm2308 = vcmask 1044480
        %v2309 = vsel %vm2308, %v2276, -inf
        %v2310 = vrot.slane %v2309, 4
        %v2311 = vmax.f32 %v2309, %v2310
        %v2312 = vrot.slane %v2311, 2
        %v2313 = vmax.f32 %v2311, %v2312
        %v2314 = vrot.slane %v2313, 1
        %v2315 = vmax.f32 %v2313, %v2314
        %v2316 = vsel %vm2308, %v2277, -inf
        %v2317 = vrot.slane %v2316, 4
        %v2318 = vmax.f32 %v2316, %v2317
        %v2319 = vrot.slane %v2318, 2
        %v2320 = vmax.f32 %v2318, %v2319
        %v2321 = vrot.slane %v2320, 1
        %v2322 = vmax.f32 %v2320, %v2321
        %v2323 = vsel %vm2308, %v2278, -inf
        %v2324 = vrot.slane %v2323, 4
        %v2325 = vmax.f32 %v2323, %v2324
        %v2326 = vrot.slane %v2325, 2
        %v2327 = vmax.f32 %v2325, %v2326
        %v2328 = vrot.slane %v2327, 1
        %v2329 = vmax.f32 %v2327, %v2328
        %v2330 = vsel %vm2308, %v2279, -inf
        %v2331 = vrot.slane %v2330, 4
        %v2332 = vmax.f32 %v2330, %v2331
        %v2333 = vrot.slane %v2332, 2
        %v2334 = vmax.f32 %v2332, %v2333
        %v2335 = vrot.slane %v2334, 1
        %v2336 = vmax.f32 %v2334, %v2335
        %v2337 = vsel %vm2308, %v2280, -inf
        %v2338 = vrot.slane %v2337, 4
        %v2339 = vmax.f32 %v2337, %v2338
        %v2340 = vrot.slane %v2339, 2
        %v2341 = vmax.f32 %v2339, %v2340
        %v2342 = vrot.slane %v2341, 1
        %v2343 = vmax.f32 %v2341, %v2342
        %v2344 = vsel %vm2308, %v2281, -inf
        %v2345 = vrot.slane %v2344, 4
        %v2346 = vmax.f32 %v2344, %v2345
        %v2347 = vrot.slane %v2346, 2
        %v2348 = vmax.f32 %v2346, %v2347
        %v2349 = vrot.slane %v2348, 1
        %v2350 = vmax.f32 %v2348, %v2349
        %v2351 = vsel %vm2308, %v2282, -inf
        %v2352 = vrot.slane %v2351, 4
        %v2353 = vmax.f32 %v2351, %v2352
        %v2354 = vrot.slane %v2353, 2
        %v2355 = vmax.f32 %v2353, %v2354
        %v2356 = vrot.slane %v2355, 1
        %v2357 = vmax.f32 %v2355, %v2356
        %v2358 = vsel %vm2308, %v2283, -inf
        %v2359 = vrot.slane %v2358, 4
        %v2360 = vmax.f32 %v2358, %v2359
        %v2361 = vrot.slane %v2360, 2
        %v2362 = vmax.f32 %v2360, %v2361
        %v2363 = vrot.slane %v2362, 1
        %v2364 = vmax.f32 %v2362, %v2363
        %v2365 = vsel %vm2308, %v2284, -inf
        %v2366 = vrot.slane %v2365, 4
        %v2367 = vmax.f32 %v2365, %v2366
        %v2368 = vrot.slane %v2367, 2
        %v2369 = vmax.f32 %v2367, %v2368
        %v2370 = vrot.slane %v2369, 1
        %v2371 = vmax.f32 %v2369, %v2370
        %v2372 = vsel %vm2308, %v2285, -inf
        %v2373 = vrot.slane %v2372, 4
        %v2374 = vmax.f32 %v2372, %v2373
        %v2375 = vrot.slane %v2374, 2
        %v2376 = vmax.f32 %v2374, %v2375
        %v2377 = vrot.slane %v2376, 1
        %v2378 = vmax.f32 %v2376, %v2377
        %v2379 = vsel %vm2308, %v2286, -inf
        %v2380 = vrot.slane %v2379, 4
        %v2381 = vmax.f32 %v2379, %v2380
        %v2382 = vrot.slane %v2381, 2
        %v2383 = vmax.f32 %v2381, %v2382
        %v2384 = vrot.slane %v2383, 1
        %v2385 = vmax.f32 %v2383, %v2384
        %v2386 = vsel %vm2308, %v2287, -inf
        %v2387 = vrot.slane %v2386, 4
        %v2388 = vmax.f32 %v2386, %v2387
        %v2389 = vrot.slane %v2388, 2
        %v2390 = vmax.f32 %v2388, %v2389
        %v2391 = vrot.slane %v2390, 1
        %v2392 = vmax.f32 %v2390, %v2391
        %v2393 = vsel %vm2308, %v2288, -inf
        %v2394 = vrot.slane %v2393, 4
        %v2395 = vmax.f32 %v2393, %v2394
        %v2396 = vrot.slane %v2395, 2
        %v2397 = vmax.f32 %v2395, %v2396
        %v2398 = vrot.slane %v2397, 1
        %v2399 = vmax.f32 %v2397, %v2398
        %v2400 = vsel %vm2308, %v2289, -inf
        %v2401 = vrot.slane %v2400, 4
        %v2402 = vmax.f32 %v2400, %v2401
        %v2403 = vrot.slane %v2402, 2
        %v2404 = vmax.f32 %v2402, %v2403
        %v2405 = vrot.slane %v2404, 1
        %v2406 = vmax.f32 %v2404, %v2405
        %v2407 = vsel %vm2308, %v2290, -inf
        %v2408 = vrot.slane %v2407, 4
        %v2409 = vmax.f32 %v2407, %v2408
        %v2410 = vrot.slane %v2409, 2
        %v2411 = vmax.f32 %v2409, %v2410
        %v2412 = vrot.slane %v2411, 1
        %v2413 = vmax.f32 %v2411, %v2412
        %v2414 = vsel %vm2308, %v2291, -inf
        %v2415 = vrot.slane %v2414, 4
        %v2416 = vmax.f32 %v2414, %v2415
        %v2417 = vrot.slane %v2416, 2
        %v2418 = vmax.f32 %v2416, %v2417
        %v2419 = vrot.slane %v2418, 1
        %v2420 = vmax.f32 %v2418, %v2419
        %v2421 = vsel %vm2308, %v2292, -inf
        %v2422 = vrot.slane %v2421, 4
        %v2423 = vmax.f32 %v2421, %v2422
        %v2424 = vrot.slane %v2423, 2
        %v2425 = vmax.f32 %v2423, %v2424
        %v2426 = vrot.slane %v2425, 1
        %v2427 = vmax.f32 %v2425, %v2426
        %v2428 = vsel %vm2308, %v2293, -inf
        %v2429 = vrot.slane %v2428, 4
        %v2430 = vmax.f32 %v2428, %v2429
        %v2431 = vrot.slane %v2430, 2
        %v2432 = vmax.f32 %v2430, %v2431
        %v2433 = vrot.slane %v2432, 1
        %v2434 = vmax.f32 %v2432, %v2433
        %v2435 = vsel %vm2308, %v2294, -inf
        %v2436 = vrot.slane %v2435, 4
        %v2437 = vmax.f32 %v2435, %v2436
        %v2438 = vrot.slane %v2437, 2
        %v2439 = vmax.f32 %v2437, %v2438
        %v2440 = vrot.slane %v2439, 1
        %v2441 = vmax.f32 %v2439, %v2440
        %v2442 = vsel %vm2308, %v2295, -inf
        %v2443 = vrot.slane %v2442, 4
        %v2444 = vmax.f32 %v2442, %v2443
        %v2445 = vrot.slane %v2444, 2
        %v2446 = vmax.f32 %v2444, %v2445
        %v2447 = vrot.slane %v2446, 1
        %v2448 = vmax.f32 %v2446, %v2447
        %v2449 = vsel %vm2308, %v2296, -inf
        %v2450 = vrot.slane %v2449, 4
        %v2451 = vmax.f32 %v2449, %v2450
        %v2452 = vrot.slane %v2451, 2
        %v2453 = vmax.f32 %v2451, %v2452
        %v2454 = vrot.slane %v2453, 1
        %v2455 = vmax.f32 %v2453, %v2454
        %v2456 = vsel %vm2308, %v2297, -inf
        %v2457 = vrot.slane %v2456, 4
        %v2458 = vmax.f32 %v2456, %v2457
        %v2459 = vrot.slane %v2458, 2
        %v2460 = vmax.f32 %v2458, %v2459
        %v2461 = vrot.slane %v2460, 1
        %v2462 = vmax.f32 %v2460, %v2461
        %v2463 = vsel %vm2308, %v2298, -inf
        %v2464 = vrot.slane %v2463, 4
        %v2465 = vmax.f32 %v2463, %v2464
        %v2466 = vrot.slane %v2465, 2
        %v2467 = vmax.f32 %v2465, %v2466
        %v2468 = vrot.slane %v2467, 1
        %v2469 = vmax.f32 %v2467, %v2468
        %v2470 = vsel %vm2308, %v2299, -inf
        %v2471 = vrot.slane %v2470, 4
        %v2472 = vmax.f32 %v2470, %v2471
        %v2473 = vrot.slane %v2472, 2
        %v2474 = vmax.f32 %v2472, %v2473
        %v2475 = vrot.slane %v2474, 1
        %v2476 = vmax.f32 %v2474, %v2475
        %v2477 = vsel %vm2308, %v2300, -inf
        %v2478 = vrot.slane %v2477, 4
        %v2479 = vmax.f32 %v2477, %v2478
        %v2480 = vrot.slane %v2479, 2
        %v2481 = vmax.f32 %v2479, %v2480
        %v2482 = vrot.slane %v2481, 1
        %v2483 = vmax.f32 %v2481, %v2482
        %v2484 = vsel %vm2308, %v2301, -inf
        %v2485 = vrot.slane %v2484, 4
        %v2486 = vmax.f32 %v2484, %v2485
        %v2487 = vrot.slane %v2486, 2
        %v2488 = vmax.f32 %v2486, %v2487
        %v2489 = vrot.slane %v2488, 1
        %v2490 = vmax.f32 %v2488, %v2489
        %v2491 = vsel %vm2308, %v2302, -inf
        %v2492 = vrot.slane %v2491, 4
        %v2493 = vmax.f32 %v2491, %v2492
        %v2494 = vrot.slane %v2493, 2
        %v2495 = vmax.f32 %v2493, %v2494
        %v2496 = vrot.slane %v2495, 1
        %v2497 = vmax.f32 %v2495, %v2496
        %v2498 = vsel %vm2308, %v2303, -inf
        %v2499 = vrot.slane %v2498, 4
        %v2500 = vmax.f32 %v2498, %v2499
        %v2501 = vrot.slane %v2500, 2
        %v2502 = vmax.f32 %v2500, %v2501
        %v2503 = vrot.slane %v2502, 1
        %v2504 = vmax.f32 %v2502, %v2503
        %v2505 = vsel %vm2308, %v2304, -inf
        %v2506 = vrot.slane %v2505, 4
        %v2507 = vmax.f32 %v2505, %v2506
        %v2508 = vrot.slane %v2507, 2
        %v2509 = vmax.f32 %v2507, %v2508
        %v2510 = vrot.slane %v2509, 1
        %v2511 = vmax.f32 %v2509, %v2510
        %v2512 = vsel %vm2308, %v2305, -inf
        %v2513 = vrot.slane %v2512, 4
        %v2514 = vmax.f32 %v2512, %v2513
        %v2515 = vrot.slane %v2514, 2
        %v2516 = vmax.f32 %v2514, %v2515
        %v2517 = vrot.slane %v2516, 1
        %v2518 = vmax.f32 %v2516, %v2517
        %v2519 = vsel %vm2308, %v2306, -inf
        %v2520 = vrot.slane %v2519, 4
        %v2521 = vmax.f32 %v2519, %v2520
        %v2522 = vrot.slane %v2521, 2
        %v2523 = vmax.f32 %v2521, %v2522
        %v2524 = vrot.slane %v2523, 1
        %v2525 = vmax.f32 %v2523, %v2524
        %v2526 = vsel %vm2308, %v2307, -inf
        %v2527 = vrot.slane %v2526, 4
        %v2528 = vmax.f32 %v2526, %v2527
        %v2529 = vrot.slane %v2528, 2
        %v2530 = vmax.f32 %v2528, %v2529
        %v2531 = vrot.slane %v2530, 1
        %v2532 = vmax.f32 %v2530, %v2531
        %vm2533 = vcmp.ge.s32.totalorder %v330, 16
        %vm2534 = vcmp.lt.s32.totalorder %v330, 24
        %vm2535 = vmand %vm2533, %vm2534
        %v2568 = vsel %vm1713, %v2322, %v2315
        %v2569 = vsel %vm1715, %v2329, %v2568
        %v2570 = vsel %vm1717, %v2336, %v2569
        %v2571 = vsel %vm1719, %v2343, %v2570
        %v2572 = vsel %vm1721, %v2350, %v2571
        %v2573 = vsel %vm1723, %v2357, %v2572
        %v2574 = vsel %vm1725, %v2364, %v2573
        %v2575 = vsel %vm1713, %v2378, %v2371
        %v2576 = vsel %vm1715, %v2385, %v2575
        %v2577 = vsel %vm1717, %v2392, %v2576
        %v2578 = vsel %vm1719, %v2399, %v2577
        %v2579 = vsel %vm1721, %v2406, %v2578
        %v2580 = vsel %vm1723, %v2413, %v2579
        %v2581 = vsel %vm1725, %v2420, %v2580
        %v2582 = vsel %vm1713, %v2434, %v2427
        %v2583 = vsel %vm1715, %v2441, %v2582
        %v2584 = vsel %vm1717, %v2448, %v2583
        %v2585 = vsel %vm1719, %v2455, %v2584
        %v2586 = vsel %vm1721, %v2462, %v2585
        %v2587 = vsel %vm1723, %v2469, %v2586
        %v2588 = vsel %vm1725, %v2476, %v2587
        %v2589 = vsel %vm1713, %v2490, %v2483
        %v2590 = vsel %vm1715, %v2497, %v2589
        %v2591 = vsel %vm1717, %v2504, %v2590
        %v2592 = vsel %vm1719, %v2511, %v2591
        %v2593 = vsel %vm1721, %v2518, %v2592
        %v2594 = vsel %vm1723, %v2525, %v2593
        %v2595 = vsel %vm1725, %v2532, %v2594
        %v2600 = vsel %vm2535, %v2574, %v2176
        %v2601 = vsel %vm2535, %v2581, %v2177
        %v2602 = vsel %vm2535, %v2588, %v2178
        %v2603 = vsel %vm2535, %v2595, %v2179
        %v2604 = vld [vmem:[%s2] sm:$0x1]
        %v2606 = vlaneseq
        %v2607 = vshrl.u32 %v2606, 7
        %v2608 = vsub.s32 0, %v2607
        %v2609 = vrot.slane %v2604, %v2608
        %v2611 = vadd.f32 %v2600, %v2609
        %v2612 = vadd.f32 %v2601, %v2609
        %v2613 = vadd.f32 %v2602, %v2609
        %v2614 = vadd.f32 %v2603, %v2609
        %v2615 = vmax.f32 %v2611, 0.0
        %v2616 = vmax.f32 %v2612, 0.0
        %v2617 = vmax.f32 %v2613, 0.0
        %v2618 = vmax.f32 %v2614, 0.0
        %v2619 = vpack.c.bf16 %v2616, %v2615
        %v2620 = vpack.c.bf16 %v2618, %v2617
        %v2621 = vld [vmem:[#allocation5] sm:$0xf]
        %v2622 = vld [vmem:[#allocation5 + $0x4] sm:$0xf]
        %v2623 = vld [vmem:[#allocation5 + $0x8] sm:$0xf]
        %v2624 = vld [vmem:[#allocation5 + $0xc] sm:$0xf]
        %v2625 = vld [vmem:[#allocation5 + $0x10] sm:$0xf]
        %v2626 = vld [vmem:[#allocation5 + $0x14] sm:$0xf]
        %v2627 = vld [vmem:[#allocation5 + $0x18] sm:$0xf]
        %v2628 = vld [vmem:[#allocation5 + $0x1c] sm:$0xf]
        %v2629 = vld [vmem:[#allocation5 + $0x20] sm:$0xf]
        %v2630 = vld [vmem:[#allocation5 + $0x24] sm:$0xf]
        %v2631 = vld [vmem:[#allocation5 + $0x28] sm:$0xf]
        %v2632 = vld [vmem:[#allocation5 + $0x2c] sm:$0xf]
        %v2633 = vld [vmem:[#allocation5 + $0x30] sm:$0xf]
        %v2634 = vld [vmem:[#allocation5 + $0x34] sm:$0xf]
        %v2635 = vld [vmem:[#allocation5 + $0x38] sm:$0xf]
        %v2636 = vld [vmem:[#allocation5 + $0x3c] sm:$0xf]
        %v2637 = vld [vmem:[#allocation5 + $0x40] sm:$0xf]
        %v2638 = vld [vmem:[#allocation5 + $0x44] sm:$0xf]
        %v2639 = vld [vmem:[#allocation5 + $0x48] sm:$0xf]
        %v2640 = vld [vmem:[#allocation5 + $0x4c] sm:$0xf]
        %v2641 = vld [vmem:[#allocation5 + $0x50] sm:$0xf]
        %v2642 = vld [vmem:[#allocation5 + $0x54] sm:$0xf]
        %v2643 = vld [vmem:[#allocation5 + $0x58] sm:$0xf]
        %v2644 = vld [vmem:[#allocation5 + $0x5c] sm:$0xf]
        %v2645 = vld [vmem:[#allocation5 + $0x60] sm:$0xf]
        %v2646 = vld [vmem:[#allocation5 + $0x64] sm:$0xf]
        %v2647 = vld [vmem:[#allocation5 + $0x68] sm:$0xf]
        %v2648 = vld [vmem:[#allocation5 + $0x6c] sm:$0xf]
        %v2649 = vld [vmem:[#allocation5 + $0x70] sm:$0xf]
        %v2650 = vld [vmem:[#allocation5 + $0x74] sm:$0xf]
        %v2651 = vld [vmem:[#allocation5 + $0x78] sm:$0xf]
        %v2652 = vld [vmem:[#allocation5 + $0x7c] sm:$0xf]
        %v2653 = vld [vmem:[%s5] sm:$0x1]
        %v2655 = vlaneseq
        %v2656 = vshrl.u32 %v2655, 7
        %v2657 = vsub.s32 0, %v2656
        %v2658 = vrot.slane %v2653, %v2657
        %v2692 = vunpack.c.l.b16 %v2621
        %v2693 = vunpack.c.l.b16 %v2622
        %v2694 = vunpack.c.l.b16 %v2623
        %v2695 = vunpack.c.l.b16 %v2624
        %v2696 = vunpack.c.l.b16 %v2625
        %v2697 = vunpack.c.l.b16 %v2626
        %v2698 = vunpack.c.l.b16 %v2627
        %v2699 = vunpack.c.l.b16 %v2628
        %v2700 = vunpack.c.l.b16 %v2629
        %v2701 = vunpack.c.l.b16 %v2630
        %v2702 = vunpack.c.l.b16 %v2631
        %v2703 = vunpack.c.l.b16 %v2632
        %v2704 = vunpack.c.l.b16 %v2633
        %v2705 = vunpack.c.l.b16 %v2634
        %v2706 = vunpack.c.l.b16 %v2635
        %v2707 = vunpack.c.l.b16 %v2636
        %v2708 = vunpack.c.l.b16 %v2637
        %v2709 = vunpack.c.l.b16 %v2638
        %v2710 = vunpack.c.l.b16 %v2639
        %v2711 = vunpack.c.l.b16 %v2640
        %v2712 = vunpack.c.l.b16 %v2641
        %v2713 = vunpack.c.l.b16 %v2642
        %v2714 = vunpack.c.l.b16 %v2643
        %v2715 = vunpack.c.l.b16 %v2644
        %v2716 = vunpack.c.l.b16 %v2645
        %v2717 = vunpack.c.l.b16 %v2646
        %v2718 = vunpack.c.l.b16 %v2647
        %v2719 = vunpack.c.l.b16 %v2648
        %v2720 = vunpack.c.l.b16 %v2649
        %v2721 = vunpack.c.l.b16 %v2650
        %v2722 = vunpack.c.l.b16 %v2651
        %v2723 = vunpack.c.l.b16 %v2652
        %v2724 = vpack.c.b16 %v2693, %v2692
        %v2725 = vpack.c.b16 %v2695, %v2694
        %v2726 = vpack.c.b16 %v2697, %v2696
        %v2727 = vpack.c.b16 %v2699, %v2698
        %v2728 = vpack.c.b16 %v2701, %v2700
        %v2729 = vpack.c.b16 %v2703, %v2702
        %v2730 = vpack.c.b16 %v2705, %v2704
        %v2731 = vpack.c.b16 %v2707, %v2706
        %v2732 = vpack.c.b16 %v2709, %v2708
        %v2733 = vpack.c.b16 %v2711, %v2710
        %v2734 = vpack.c.b16 %v2713, %v2712
        %v2735 = vpack.c.b16 %v2715, %v2714
        %v2736 = vpack.c.b16 %v2717, %v2716
        %v2737 = vpack.c.b16 %v2719, %v2718
        %v2738 = vpack.c.b16 %v2721, %v2720
        %v2739 = vpack.c.b16 %v2723, %v2722
        %2756 = vmatprep.subr.bf16.mxu0 0
        %2757 = vmatpush1.bf16.msra.mxu0 %v2731
        %2758 = vmatprep.subr.bf16.mxu0 0
        %2759 = vmatpush1.bf16.msra.mxu0 %v2730
        %2760 = vmatprep.subr.bf16.mxu0 0
        %2761 = vmatpush1.bf16.msra.mxu0 %v2729
        %2762 = vmatprep.subr.bf16.mxu0 0
        %2763 = vmatpush1.bf16.msra.mxu0 %v2728
        %2764 = vmatprep.subr.bf16.mxu0 0
        %2765 = vmatpush1.bf16.msra.mxu0 %v2727
        %2766 = vmatprep.subr.bf16.mxu0 0
        %2767 = vmatpush1.bf16.msra.mxu0 %v2726
        %2768 = vmatprep.subr.bf16.mxu0 0
        %2769 = vmatpush1.bf16.msra.mxu0 %v2725
        %2770 = vmatprep.subr.bf16.mxu0 0
        %2771 = vmatpush1.bf16.msra.mxu0 %v2724
        %2772 = vmatprep.subr.bf16.mxu0 0
        %2773 = vmatpush2.bf16.msra.mxu0 %v2739
        %2774 = vmatprep.subr.bf16.mxu0 0
        %2775 = vmatpush2.bf16.msra.mxu0 %v2738
        %2776 = vmatprep.subr.bf16.mxu0 0
        %2777 = vmatpush2.bf16.msra.mxu0 %v2737
        %2778 = vmatprep.subr.bf16.mxu0 0
        %2779 = vmatpush2.bf16.msra.mxu0 %v2736
        %2780 = vmatprep.subr.bf16.mxu0 0
        %2781 = vmatpush2.bf16.msra.mxu0 %v2735
        %2782 = vmatprep.subr.bf16.mxu0 0
        %2783 = vmatpush2.bf16.msra.mxu0 %v2734
        %2784 = vmatprep.subr.bf16.mxu0 0
        %2785 = vmatpush2.bf16.msra.mxu0 %v2733
        %2786 = vmatprep.subr.bf16.mxu0 0
        %2787 = vmatpush2.bf16.msra.mxu0 %v2732
        %2788 = vmatprep.mubr.bf16.mxu0 %v2619
        %2789 = vmatmul.mubr.bf16.gmra.mxu0 0
        %v2790 = vpop.f32.mrf.mxu0
        %v2791 = vadd.f32 %v2658, %v2790
        %v2792 = vpop.f32.mrf.mxu0
        %v2793 = vpop.f32.mrf.mxu0
        %v2794 = vadd.f32 %v2658, %v2793
        %v2795 = vpop.f32.mrf.mxu0
        %2796 = vmatprep.mubr.bf16.mxu0 %v2620
        %2797 = vmatmul.mubr.bf16.gmra.mxu0 0
        %v2798 = vpop.f32.mrf.mxu0
        %v2799 = vadd.f32 %v2658, %v2798
        %v2800 = vpop.f32.mrf.mxu0
        %v2801 = vpop.f32.mrf.mxu0
        %v2802 = vadd.f32 %v2658, %v2801
        %v2803 = vpop.f32.mrf.mxu0
        %2804 = vdwg.mxu0
        %v2805 = vadd.f32 %v2791, 0.0
        %v2806 = vadd.f32 %v2794, 0.0
        %v2807 = vadd.f32 %v2799, 0.0
        %v2808 = vadd.f32 %v2802, 0.0
        %v2809 = vpack.c.bf16 %v2806, %v2805
        %v2810 = vpack.c.bf16 %v2808, %v2807
        %v2811 = vld [vmem:[#allocation7] sm:$0xf]
        %v2812 = vld [vmem:[#allocation7 + $0x4] sm:$0xf]
        %v2813 = vld [vmem:[#allocation7 + $0x8] sm:$0xf]
        %v2814 = vld [vmem:[#allocation7 + $0xc] sm:$0xf]
        %v2815 = vld [vmem:[#allocation7 + $0x10] sm:$0xf]
        %v2816 = vld [vmem:[#allocation7 + $0x14] sm:$0xf]
        %v2817 = vld [vmem:[#allocation7 + $0x18] sm:$0xf]
        %v2818 = vld [vmem:[#allocation7 + $0x1c] sm:$0xf]
        %v2819 = vld [vmem:[#allocation7 + $0x20] sm:$0xf]
        %v2820 = vld [vmem:[#allocation7 + $0x24] sm:$0xf]
        %v2821 = vld [vmem:[#allocation7 + $0x28] sm:$0xf]
        %v2822 = vld [vmem:[#allocation7 + $0x2c] sm:$0xf]
        %v2823 = vld [vmem:[#allocation7 + $0x30] sm:$0xf]
        %v2824 = vld [vmem:[#allocation7 + $0x34] sm:$0xf]
        %v2825 = vld [vmem:[#allocation7 + $0x38] sm:$0xf]
        %v2826 = vld [vmem:[#allocation7 + $0x3c] sm:$0xf]
        %v2827 = vld [vmem:[#allocation7 + $0x40] sm:$0xf]
        %v2828 = vld [vmem:[#allocation7 + $0x44] sm:$0xf]
        %v2829 = vld [vmem:[#allocation7 + $0x48] sm:$0xf]
        %v2830 = vld [vmem:[#allocation7 + $0x4c] sm:$0xf]
        %v2831 = vld [vmem:[#allocation7 + $0x50] sm:$0xf]
        %v2832 = vld [vmem:[#allocation7 + $0x54] sm:$0xf]
        %v2833 = vld [vmem:[#allocation7 + $0x58] sm:$0xf]
        %v2834 = vld [vmem:[#allocation7 + $0x5c] sm:$0xf]
        %v2835 = vld [vmem:[#allocation7 + $0x60] sm:$0xf]
        %v2836 = vld [vmem:[#allocation7 + $0x64] sm:$0xf]
        %v2837 = vld [vmem:[#allocation7 + $0x68] sm:$0xf]
        %v2838 = vld [vmem:[#allocation7 + $0x6c] sm:$0xf]
        %v2839 = vld [vmem:[#allocation7 + $0x70] sm:$0xf]
        %v2840 = vld [vmem:[#allocation7 + $0x74] sm:$0xf]
        %v2841 = vld [vmem:[#allocation7 + $0x78] sm:$0xf]
        %v2842 = vld [vmem:[#allocation7 + $0x7c] sm:$0xf]
        %v2843 = vld [vmem:[%s6] sm:$0x1]
        %v2845 = vlaneseq
        %v2846 = vshrl.u32 %v2845, 7
        %v2847 = vsub.s32 0, %v2846
        %v2848 = vrot.slane %v2843, %v2847
        %v2882 = vunpack.c.l.b16 %v2811
        %v2883 = vunpack.c.l.b16 %v2812
        %v2884 = vunpack.c.l.b16 %v2813
        %v2885 = vunpack.c.l.b16 %v2814
        %v2886 = vunpack.c.l.b16 %v2815
        %v2887 = vunpack.c.l.b16 %v2816
        %v2888 = vunpack.c.l.b16 %v2817
        %v2889 = vunpack.c.l.b16 %v2818
        %v2890 = vunpack.c.l.b16 %v2819
        %v2891 = vunpack.c.l.b16 %v2820
        %v2892 = vunpack.c.l.b16 %v2821
        %v2893 = vunpack.c.l.b16 %v2822
        %v2894 = vunpack.c.l.b16 %v2823
        %v2895 = vunpack.c.l.b16 %v2824
        %v2896 = vunpack.c.l.b16 %v2825
        %v2897 = vunpack.c.l.b16 %v2826
        %v2898 = vunpack.c.l.b16 %v2827
        %v2899 = vunpack.c.l.b16 %v2828
        %v2900 = vunpack.c.l.b16 %v2829
        %v2901 = vunpack.c.l.b16 %v2830
        %v2902 = vunpack.c.l.b16 %v2831
        %v2903 = vunpack.c.l.b16 %v2832
        %v2904 = vunpack.c.l.b16 %v2833
        %v2905 = vunpack.c.l.b16 %v2834
        %v2906 = vunpack.c.l.b16 %v2835
        %v2907 = vunpack.c.l.b16 %v2836
        %v2908 = vunpack.c.l.b16 %v2837
        %v2909 = vunpack.c.l.b16 %v2838
        %v2910 = vunpack.c.l.b16 %v2839
        %v2911 = vunpack.c.l.b16 %v2840
        %v2912 = vunpack.c.l.b16 %v2841
        %v2913 = vunpack.c.l.b16 %v2842
        %v2914 = vpack.c.b16 %v2883, %v2882
        %v2915 = vpack.c.b16 %v2885, %v2884
        %v2916 = vpack.c.b16 %v2887, %v2886
        %v2917 = vpack.c.b16 %v2889, %v2888
        %v2918 = vpack.c.b16 %v2891, %v2890
        %v2919 = vpack.c.b16 %v2893, %v2892
        %v2920 = vpack.c.b16 %v2895, %v2894
        %v2921 = vpack.c.b16 %v2897, %v2896
        %v2922 = vpack.c.b16 %v2899, %v2898
        %v2923 = vpack.c.b16 %v2901, %v2900
        %v2924 = vpack.c.b16 %v2903, %v2902
        %v2925 = vpack.c.b16 %v2905, %v2904
        %v2926 = vpack.c.b16 %v2907, %v2906
        %v2927 = vpack.c.b16 %v2909, %v2908
        %v2928 = vpack.c.b16 %v2911, %v2910
        %v2929 = vpack.c.b16 %v2913, %v2912
        %2946 = vmatprep.subr.bf16.mxu0 0
        %2947 = vmatpush1.bf16.msra.mxu0 %v2921
        %2948 = vmatprep.subr.bf16.mxu0 0
        %2949 = vmatpush1.bf16.msra.mxu0 %v2920
        %2950 = vmatprep.subr.bf16.mxu0 0
        %2951 = vmatpush1.bf16.msra.mxu0 %v2919
        %2952 = vmatprep.subr.bf16.mxu0 0
        %2953 = vmatpush1.bf16.msra.mxu0 %v2918
        %2954 = vmatprep.subr.bf16.mxu0 0
        %2955 = vmatpush1.bf16.msra.mxu0 %v2917
        %2956 = vmatprep.subr.bf16.mxu0 0
        %2957 = vmatpush1.bf16.msra.mxu0 %v2916
        %2958 = vmatprep.subr.bf16.mxu0 0
        %2959 = vmatpush1.bf16.msra.mxu0 %v2915
        %2960 = vmatprep.subr.bf16.mxu0 0
        %2961 = vmatpush1.bf16.msra.mxu0 %v2914
        %2962 = vmatprep.subr.bf16.mxu0 0
        %2963 = vmatpush2.bf16.msra.mxu0 %v2929
        %2964 = vmatprep.subr.bf16.mxu0 0
        %2965 = vmatpush2.bf16.msra.mxu0 %v2928
        %2966 = vmatprep.subr.bf16.mxu0 0
        %2967 = vmatpush2.bf16.msra.mxu0 %v2927
        %2968 = vmatprep.subr.bf16.mxu0 0
        %2969 = vmatpush2.bf16.msra.mxu0 %v2926
        %2970 = vmatprep.subr.bf16.mxu0 0
        %2971 = vmatpush2.bf16.msra.mxu0 %v2925
        %2972 = vmatprep.subr.bf16.mxu0 0
        %2973 = vmatpush2.bf16.msra.mxu0 %v2924
        %2974 = vmatprep.subr.bf16.mxu0 0
        %2975 = vmatpush2.bf16.msra.mxu0 %v2923
        %2976 = vmatprep.subr.bf16.mxu0 0
        %2977 = vmatpush2.bf16.msra.mxu0 %v2922
        %2978 = vmatprep.mubr.bf16.mxu0 %v2619
        %2979 = vmatmul.mubr.bf16.gmra.mxu0 %v2809
        %v2980 = vpop.f32.mrf.mxu0
        %v2981 = vadd.f32 %v2848, %v2980
        %v2982 = vpop.f32.mrf.mxu0
        %v2983 = vpop.f32.mrf.mxu0
        %v2984 = vadd.f32 %v2848, %v2983
        %v2985 = vpop.f32.mrf.mxu0
        %2986 = vmatprep.mubr.bf16.mxu0 %v2620
        %2987 = vmatmul.mubr.bf16.gmra.mxu0 %v2810
        %v2988 = vpop.f32.mrf.mxu0
        %v2989 = vadd.f32 %v2848, %v2988
        %v2990 = vpop.f32.mrf.mxu0
        %v2991 = vpop.f32.mrf.mxu0
        %v2992 = vadd.f32 %v2848, %v2991
        %v2993 = vpop.f32.mrf.mxu0
        %2994 = vdwg.mxu0
        %v2995 = vadd.f32 %v2805, %v2981
        %v2996 = vadd.f32 %v2806, %v2984
        %v2997 = vadd.f32 %v2807, %v2989
        %v2998 = vadd.f32 %v2808, %v2992
        %2999 = vst [vmem:[%s316] sm:$0xff] %v2995
        %3000 = vst [vmem:[%s316 + $0x8] sm:$0xff] %v2996
        %3001 = vst [vmem:[%s316 + $0x10] sm:$0xff] %v2997
        %3002 = vst [vmem:[%s316 + $0x18] sm:$0xff] %v2998
        %s3003 = sand.u32 %s183, 1
        %s3004 = scalar_lea.sflag [#allocation4], %s3003
        %s3005 = sand.u32 %s183, 1
        %s3006 = smul.addr %s3005, 32
        %s3007 = scalar_lea.vmem [#allocation8], %s3006
        // Predicated region
        $region61: #{tpu_custom_call.1} parent=47 // pred_check
          %p3008 = pneg %p193
        $region62: #{tpu_custom_call.1} parent=47 // pred_check_branch
          %3010 = sbr.rel (%p3008) target = $region64
        $region63: #{tpu_custom_call.1} parent=47 // pred_region
          %s3011 = smul.u32 4, %s23
          %s3013 = ssub.s32 512, 512
          %3014 = vsyncadd %s3004, %s3013
          %s3015 = smul.addr %s3011, 128
          %s3016 = scalar_lea.hbm %s7, %s3015
          %s3017 = sshll.u32 %s3007, 4
          %s3018 = int_to_ptr.vmem [resolvable:$true] %s3017
          %3023 = dma.vmem_to_hbm [thread:$0]  %s3018, 512, %s3016, %s3004, 128, 128, 8
        $region64: #{tpu_custom_call.1} parent=47 // pred_fallthru
          _
      $region48: #{tpu_custom_call.1} parent=5 // pred_fallthru
        _
      %p3024 = scmp.le.s32.totalorder 2, %s18
      // Predicated region
      $region65: #{tpu_custom_call.1} parent=5 // pred_check
        %p3025 = pneg %p3024
      $region66: #{tpu_custom_call.1} parent=5 // pred_check_branch
        %3027 = sbr.rel (%p3025) target = $region68
      $region67: #{tpu_custom_call.1} parent=5 // pred_region
        %s3028 = ssub.s32 %s18, 2
        // Predicated region
        $region69: #{tpu_custom_call.1} parent=67 // pred_check
          %p3029 = pneg %p199
        $region70: #{tpu_custom_call.1} parent=67 // pred_check_branch
          %3031 = sbr.rel (%p3029) target = $region72
        $region71: #{tpu_custom_call.1} parent=67 // pred_region
          %s3032 = sand.u32 %s184, 1
          %s3033 = scalar_lea.sflag [#allocation4], %s3032
          %s3034 = sand.u32 %s184, 1
          %s3035 = smul.addr %s3034, 32
          %s3036 = scalar_lea.vmem [#allocation8], %s3035
          %3037 = dma.done %s3033, 512
        $region72: #{tpu_custom_call.1} parent=67 // pred_fallthru
          _
      $region68: #{tpu_custom_call.1} parent=5 // pred_fallthru
        _
    $region6: #{tpu_custom_call.1} parent=1 // loop_footer
      %s22 = sadd.s32 1, %s18
    $region7: #{tpu_custom_call.1} parent=1 // loop_footer_branch
      %17 = sbr.rel target = $region3
    $region8: #{tpu_custom_call.1} parent=1 // loop_exit
      _
    %3038 = vsyncpa [#allocation3], 1
    %s3039 = scalar_lea.sflag [#allocation3], 1
    %3040 = vsyncpa %s3039, 1
    %3041 = vsyncpa [#allocation6], 1
    %3042 = vsyncpa [#allocation4], 1
    %s3043 = scalar_lea.sflag [#allocation4], 1
    %3044 = vsyncpa %s3043, 1

</llo_original>
